<compile_context>
chip_gen: v5e
topology: v5e:2x2
jax: 0.10.0
libtpu: 0.0.40
codegen_flags: <defaults>
</compile_context>

<pallas_src>
import functools

import jax
import jax.numpy as jnp
import numpy as np
from jax.experimental import pallas as pl
from jax.experimental.pallas import tpu as pltpu


# ----------------------------------------------------------------------------
# Fused Pallas kernel
# ----------------------------------------------------------------------------

def bilstm_fused_kernel(*refs, seq_len, batch, hidden, num_layers):
    """All bidirectional LSTM layers + final Linear in a single invocation.

    refs layout (inputs..., outputs..., scratch...):
      [0]                 x_cat    (T*B, 2*D)  row block t = [x[t] | x[T-1-t]]
      [1+3L .. 3+3L]      per-layer packed (w_ih_cat, w_hh_cat, b_cat)
      [1+3*NL]            w_fc_cat (4H, out_dim)
      [2+3*NL]            b_fc     (1, out_dim)
      [3+3*NL]            out_ref  (B, out_dim)
      [4+3*NL]            gx_ref   (T*B, 8H)   VMEM scratch

    Gate columns are interleaved per gate type across directions:
      [i_f, i_b, f_f, f_b, g_f, g_b, o_f, o_b]  (each block H wide)
    so every gate slice is a contiguous 2H-lane group and the packed (B, 2H)
    state [h_f | h_b] needs exactly ONE block-diagonal (2H, 8H) matmul per step.
    hs[t] semantics: [h_fwd(time t) | h_bwd(time T-1-t)].
    """
    T, B, H = seq_len, batch, hidden
    f32 = jnp.float32

    x_ref = refs[0]
    layer_refs = refs[1:1 + 3 * num_layers]
    w_fc_ref = refs[1 + 3 * num_layers]
    b_fc_ref = refs[2 + 3 * num_layers]
    out_ref = refs[3 + 3 * num_layers]
    gx_ref = refs[4 + 3 * num_layers]

    x_cat = x_ref[...]
    hs = []
    for layer in range(num_layers):
        w_ih = layer_refs[3 * layer][...]
        w_hh = layer_refs[3 * layer + 1][...]
        b = layer_refs[3 * layer + 2][...]

        # Hoisted input projection: one MXU matmul for the whole sequence and
        # both directions; spilled to VMEM scratch so the unrolled recurrence
        # reads per-step row blocks with short vld's instead of vreg extracts.
        gx_ref[...] = jnp.dot(x_cat, w_ih, preferred_element_type=f32) + b

        h = jnp.zeros((B, 2 * H), f32)   # [h_fwd | h_bwd]
        c = jnp.zeros((B, 2 * H), f32)
        hs = []
        for t in range(T):
            gates = gx_ref[t * B:(t + 1) * B, :] + jnp.dot(
                h, w_hh, preferred_element_type=f32)            # (B, 8H)
            ii = jax.nn.sigmoid(gates[:, 0 * H:2 * H])
            ff = jax.nn.sigmoid(gates[:, 2 * H:4 * H])
            gg = jnp.tanh(gates[:, 4 * H:6 * H])
            oo = jax.nn.sigmoid(gates[:, 6 * H:8 * H])
            c = ff * c + ii * gg
            h = oo * jnp.tanh(c)
            hs.append(h)                  # [h_fwd(t) | h_bwd(T-1-t)]

        if layer < num_layers - 1:
            # Next layer's pre-concatenated input: row block t = [hs[t] | hs[T-1-t]].
            # Assembled once from register-buffered values (no per-step masked
            # partial stores); the next layer's packed W_ih accounts for this
            # column permutation.
            rows = [jnp.concatenate([hs[t], hs[T - 1 - t]], axis=1)
                    for t in range(T)]                          # each (B, 4H)
            x_cat = jnp.concatenate(rows, axis=0)               # (T*B, 4H)

    # Final Linear fused in.  It only needs [h_fwd(T-1) | h_bwd(T-1)]; the
    # packed w_fc_cat (4H, out) selects those columns out of [hs[T-1] | hs[0]].
    last = jnp.concatenate([hs[T - 1], hs[0]], axis=1)          # (B, 4H)
    out_ref[...] = (jnp.dot(last, w_fc_ref[...], preferred_element_type=f32)
                    + b_fc_ref[...]).astype(out_ref.dtype)


# ----------------------------------------------------------------------------
# Weight packing (one-time layout transform, plain numpy)
# ----------------------------------------------------------------------------

def pack_params(params, input_dim, hidden_dim, num_layers):
    H = hidden_dim
    packed = {}
    for layer in range(num_layers):
        d_in = input_dim if layer == 0 else 2 * H
        wf = np.asarray(params[f"w_ih_l{layer}_fwd"], np.float32)   # (d_in, 4H)
        wb = np.asarray(params[f"w_ih_l{layer}_bwd"], np.float32)
        hf = np.asarray(params[f"w_hh_l{layer}_fwd"], np.float32)   # (H, 4H)
        hb = np.asarray(params[f"w_hh_l{layer}_bwd"], np.float32)
        bf = np.asarray(params[f"b_l{layer}_fwd"], np.float32)      # (1, 4H)
        bb = np.asarray(params[f"b_l{layer}_bwd"], np.float32)

        w_ih = np.zeros((2 * d_in, 8 * H), np.float32)
        w_hh = np.zeros((2 * H, 8 * H), np.float32)
        b = np.zeros((1, 8 * H), np.float32)
        for k in range(4):
            fcol = slice(2 * k * H, 2 * k * H + H)          # fwd gate k (interleaved)
            bcol = slice(2 * k * H + H, 2 * (k + 1) * H)    # bwd gate k (interleaved)
            gcol = slice(k * H, (k + 1) * H)                # original gate k columns
            if layer == 0:
                # kernel input row block t = [x[t] (0:D) | x[T-1-t] (D:2D)]
                w_ih[0:d_in, fcol] = wf[:, gcol]
                w_ih[d_in:2 * d_in, bcol] = wb[:, gcol]
            else:
                # kernel input row block t = [h_f[t], h_b[T-1-t], h_f[T-1-t], h_b[t]]
                w_ih[0:H, fcol] = wf[0:H, gcol]              # h_f[t]     -> fwd gates
                w_ih[3 * H:4 * H, fcol] = wf[H:2 * H, gcol]  # h_b[t]     -> fwd gates
                w_ih[2 * H:3 * H, bcol] = wb[0:H, gcol]      # h_f[T-1-t] -> bwd gates
                w_ih[H:2 * H, bcol] = wb[H:2 * H, gcol]      # h_b[T-1-t] -> bwd gates
            # block-diagonal recurrent weights for the packed [h_f | h_b] state
            w_hh[0:H, fcol] = hf[:, gcol]
            w_hh[H:2 * H, bcol] = hb[:, gcol]
            b[:, fcol] = bf[:, gcol]
            b[:, bcol] = bb[:, gcol]
        packed[f"w_ih_l{layer}"] = jnp.asarray(w_ih)
        packed[f"w_hh_l{layer}"] = jnp.asarray(w_hh)
        packed[f"b_l{layer}"] = jnp.asarray(b)

    # FC packed for last = [hs[T-1] | hs[0]]
    #   = [h_f(T-1) (0:H), h_b(0) (H:2H), h_f(0) (2H:3H), h_b(T-1) (3H:4H)]
    w_fc = np.asarray(params["w_fc"], np.float32)            # (2H, out)
    out_dim = w_fc.shape[1]
    w_fc_cat = np.zeros((4 * H, out_dim), np.float32)
    w_fc_cat[0:H] = w_fc[0:H]                                # h_f(T-1) rows
    w_fc_cat[3 * H:4 * H] = w_fc[H:2 * H]                    # h_b(T-1) rows
    packed["w_fc"] = jnp.asarray(w_fc_cat)
    packed["b_fc"] = jnp.asarray(params["b_fc"])
    return packed


# ----------------------------------------------------------------------------
# Wrapper
# ----------------------------------------------------------------------------

def bilstm_forward(x_btd, packed, hidden_dim, num_layers):
    """Full BiLSTM.forward: x (B, T, D) -> logits (B, output_dim)."""
    B, T, D = x_btd.shape
    H = hidden_dim

    # batch_first -> time-major rows; build the [x[t] | x[T-1-t]] slab once.
    x = jnp.transpose(x_btd, (1, 0, 2)).astype(jnp.float32).reshape(T * B, D)
    x_rev = x.reshape(T, B, D)[::-1].reshape(T * B, D)
    x_cat = jnp.concatenate([x, x_rev], axis=1)              # (T*B, 2D)

    args = [x_cat]
    for layer in range(num_layers):
        args += [packed[f"w_ih_l{layer}"],
                 packed[f"w_hh_l{layer}"],
                 packed[f"b_l{layer}"]]
    args += [packed["w_fc"], packed["b_fc"]]
    out_dim = packed["b_fc"].shape[1]

    kernel = functools.partial(bilstm_fused_kernel, seq_len=T, batch=B,
                               hidden=H, num_layers=num_layers)
    return pl.pallas_call(
        kernel,
        out_shape=jax.ShapeDtypeStruct((B, out_dim), jnp.float32),
        scratch_shapes=[pltpu.VMEM((T * B, 8 * H), jnp.float32)],
    )(*args)


# ----------------------------------------------------------------------------
# Pure-JAX reference (for correctness check)
# ----------------------------------------------------------------------------

def lstm_direction_ref(x_tbd, w_ih, w_hh, b, hidden_dim, reverse):
    H = hidden_dim
    xs = x_tbd[::-1] if reverse else x_tbd
    B = x_tbd.shape[1]

    def step(carry, x_t):
        h, c = carry
        gates = x_t @ w_ih + h @ w_hh + b
        i_g = jax.nn.sigmoid(gates[:, 0 * H:1 * H])
        f_g = jax.nn.sigmoid(gates[:, 1 * H:2 * H])
        g_g = jnp.tanh(gates[:, 2 * H:3 * H])
        o_g = jax.nn.sigmoid(gates[:, 3 * H:4 * H])
        c = f_g * c + i_g * g_g
        h = o_g * jnp.tanh(c)
        return (h, c), h

    h0 = jnp.zeros((B, H), jnp.float32)
    c0 = jnp.zeros((B, H), jnp.float32)
    _, hs = jax.lax.scan(step, (h0, c0), xs)
    return hs[::-1] if reverse else hs


def bilstm_forward_ref(x_btd, params, hidden_dim, num_layers):
    x = jnp.transpose(x_btd, (1, 0, 2)).astype(jnp.float32)
    for layer in range(num_layers):
        fwd = lstm_direction_ref(
            x, params[f"w_ih_l{layer}_fwd"], params[f"w_hh_l{layer}_fwd"],
            params[f"b_l{layer}_fwd"], hidden_dim, reverse=False)
        bwd = lstm_direction_ref(
            x, params[f"w_ih_l{layer}_bwd"], params[f"w_hh_l{layer}_bwd"],
            params[f"b_l{layer}_bwd"], hidden_dim, reverse=True)
        x = jnp.concatenate([fwd, bwd], axis=-1)
    return x[-1] @ params["w_fc"] + params["b_fc"]


# ----------------------------------------------------------------------------
# Deterministic parameter init (PyTorch nn.LSTM-style uniform(-1/sqrt(H), 1/sqrt(H)))
# ----------------------------------------------------------------------------

def init_params(key, input_dim, hidden_dim, output_dim, num_layers):
    params = {}
    H = hidden_dim
    bound = 1.0 / np.sqrt(H)
    for layer in range(num_layers):
        d_in = input_dim if layer == 0 else 2 * H
        for direction in ("fwd", "bwd"):
            key, k1, k2, k3, k4 = jax.random.split(key, 5)
            params[f"w_ih_l{layer}_{direction}"] = jax.random.uniform(
                k1, (d_in, 4 * H), jnp.float32, -bound, bound)
            params[f"w_hh_l{layer}_{direction}"] = jax.random.uniform(
                k2, (H, 4 * H), jnp.float32, -bound, bound)
            b_ih = jax.random.uniform(k3, (1, 4 * H), jnp.float32, -bound, bound)
            b_hh = jax.random.uniform(k4, (1, 4 * H), jnp.float32, -bound, bound)
            params[f"b_l{layer}_{direction}"] = b_ih + b_hh
    key, k1, k2 = jax.random.split(key, 3)
    fc_bound = 1.0 / np.sqrt(2 * H)
    params["w_fc"] = jax.random.uniform(
        k1, (2 * H, output_dim), jnp.float32, -fc_bound, fc_bound)
    params["b_fc"] = jax.random.uniform(
        k2, (1, output_dim), jnp.float32, -fc_bound, fc_bound)
    return params


# ----------------------------------------------------------------------------
# Main
# ----------------------------------------------------------------------------

if __name__ == "__main__":
    # Small shapes consistent with BiLSTM.forward: x is (batch, seq, input_dim).
    batch, seq, input_dim = 2, 8, 16
    hidden_dim, output_dim, num_layers = 32, 8, 2

    key = jax.random.PRNGKey(0)
    key, kx = jax.random.split(key)
    x = jax.random.normal(kx, (batch, seq, input_dim), jnp.float32)
    params = init_params(key, input_dim, hidden_dim, output_dim, num_layers)
    packed = pack_params(params, input_dim, hidden_dim, num_layers)

    fwd = jax.jit(functools.partial(
        bilstm_forward, hidden_dim=hidden_dim, num_layers=num_layers))
    out = fwd(x, packed)
    out = jax.block_until_ready(out)

    ref = bilstm_forward_ref(x, params, hidden_dim, num_layers)
    np.testing.assert_allclose(np.asarray(out), np.asarray(ref),
                               rtol=1e-5, atol=1e-5)

    assert out.shape == (batch, output_dim)
    print("KERNEL_OK")
</pallas_src>

<mosaic_0001>
module attributes {stable_mosaic.version = 11 : i64} {
  func.func @bilstm_fused_kernel(%arg0: memref<16x32xf32, #tpu.memory_space<vmem>>, %arg1: memref<32x256xf32, #tpu.memory_space<vmem>>, %arg2: memref<64x256xf32, #tpu.memory_space<vmem>>, %arg3: memref<1x256xf32, #tpu.memory_space<vmem>>, %arg4: memref<128x256xf32, #tpu.memory_space<vmem>>, %arg5: memref<64x256xf32, #tpu.memory_space<vmem>>, %arg6: memref<1x256xf32, #tpu.memory_space<vmem>>, %arg7: memref<128x8xf32, #tpu.memory_space<vmem>>, %arg8: memref<1x8xf32, #tpu.memory_space<vmem>>, %arg9: memref<2x8xf32, #tpu.memory_space<vmem>>, %arg10: memref<16x256xf32, #tpu.memory_space<vmem>>) attributes {dimension_semantics = [], scalar_prefetch = 0 : i64, scratch_operands = 1 : i64, tpu.core_type = #tpu.core_type<tc>} {
    %c0 = arith.constant 0 : index
    %c0_0 = arith.constant 0 : index
    %0 = vector.load %arg0[%c0, %c0_0] : memref<16x32xf32, #tpu.memory_space<vmem>>, vector<16x32xf32>
    %c0_1 = arith.constant 0 : index
    %c0_2 = arith.constant 0 : index
    %1 = vector.load %arg1[%c0_1, %c0_2] : memref<32x256xf32, #tpu.memory_space<vmem>>, vector<32x256xf32>
    %c0_3 = arith.constant 0 : index
    %c0_4 = arith.constant 0 : index
    %2 = vector.load %arg2[%c0_3, %c0_4] : memref<64x256xf32, #tpu.memory_space<vmem>>, vector<64x256xf32>
    %c0_5 = arith.constant 0 : index
    %c0_6 = arith.constant 0 : index
    %3 = vector.load %arg3[%c0_5, %c0_6] : memref<1x256xf32, #tpu.memory_space<vmem>>, vector<1x256xf32>
    %cst = arith.constant dense<0.000000e+00> : vector<16x256xf32>
    %4 = tpu.matmul %0, %1, %cst {dimension_numbers = #tpu.dot_dimension_numbers<[1], [0], [0], [1], [0, 0, 1, 1], [], []>} : vector<16x32xf32>, vector<32x256xf32>, vector<16x256xf32> -> vector<16x256xf32>
    %5 = vector.broadcast %3 : vector<1x256xf32> to vector<16x256xf32>
    %6 = arith.addf %4, %5 : vector<16x256xf32>
    %c0_7 = arith.constant 0 : index
    %c0_8 = arith.constant 0 : index
    %7 = vector.load %arg10[%c0_7, %c0_8] : memref<16x256xf32, #tpu.memory_space<vmem>>, vector<16x256xf32>
    tpu.vector_store %arg10[%c0_7, %c0_8], %6 {strides = array<i32>} : memref<16x256xf32, #tpu.memory_space<vmem>>, vector<16x256xf32>,
    %cst_9 = arith.constant 0.000000e+00 : f32
    %8 = vector.broadcast %cst_9 : f32 to vector<2x64xf32>
    %cst_10 = arith.constant 0.000000e+00 : f32
    %9 = vector.broadcast %cst_10 : f32 to vector<2x64xf32>
    %c0_11 = arith.constant 0 : index
    %c0_12 = arith.constant 0 : index
    %10 = vector.load %arg10[%c0_11, %c0_12] : memref<16x256xf32, #tpu.memory_space<vmem>>, vector<2x256xf32>
    %cst_13 = arith.constant dense<0.000000e+00> : vector<2x256xf32>
    %11 = tpu.matmul %8, %2, %cst_13 {dimension_numbers = #tpu.dot_dimension_numbers<[1], [0], [0], [1], [0, 0, 1, 1], [], []>} : vector<2x64xf32>, vector<64x256xf32>, vector<2x256xf32> -> vector<2x256xf32>
    %12 = arith.addf %10, %11 : vector<2x256xf32>
    %13 = vector.extract_strided_slice %12 {offsets = [0, 0], sizes = [2, 64], strides = [1, 1]} : vector<2x256xf32> to vector<2x64xf32>
    %14 = arith.negf %13 : vector<2x64xf32>
    %15 = math.exp %14 : vector<2x64xf32>
    %cst_14 = arith.constant 1.000000e+00 : f32
    %16 = vector.broadcast %cst_14 : f32 to vector<2x64xf32>
    %17 = arith.addf %16, %15 : vector<2x64xf32>
    %18 = arith.divf %16, %17 : vector<2x64xf32>
    %19 = vector.extract_strided_slice %12 {offsets = [0, 64], sizes = [2, 64], strides = [1, 1]} : vector<2x256xf32> to vector<2x64xf32>
    %20 = arith.negf %19 : vector<2x64xf32>
    %21 = math.exp %20 : vector<2x64xf32>
    %cst_15 = arith.constant 1.000000e+00 : f32
    %22 = vector.broadcast %cst_15 : f32 to vector<2x64xf32>
    %23 = arith.addf %22, %21 : vector<2x64xf32>
    %24 = arith.divf %22, %23 : vector<2x64xf32>
    %25 = vector.extract_strided_slice %12 {offsets = [0, 128], sizes = [2, 64], strides = [1, 1]} : vector<2x256xf32> to vector<2x64xf32>
    %26 = math.tanh %25 : vector<2x64xf32>
    %27 = vector.extract_strided_slice %12 {offsets = [0, 192], sizes = [2, 64], strides = [1, 1]} : vector<2x256xf32> to vector<2x64xf32>
    %28 = arith.negf %27 : vector<2x64xf32>
    %29 = math.exp %28 : vector<2x64xf32>
    %cst_16 = arith.constant 1.000000e+00 : f32
    %30 = vector.broadcast %cst_16 : f32 to vector<2x64xf32>
    %31 = arith.addf %30, %29 : vector<2x64xf32>
    %32 = arith.divf %30, %31 : vector<2x64xf32>
    %33 = arith.mulf %24, %9 : vector<2x64xf32>
    %34 = arith.mulf %18, %26 : vector<2x64xf32>
    %35 = arith.addf %33, %34 : vector<2x64xf32>
    %36 = math.tanh %35 : vector<2x64xf32>
    %37 = arith.mulf %32, %36 : vector<2x64xf32>
    %c2 = arith.constant 2 : index
    %c0_17 = arith.constant 0 : index
    %38 = vector.load %arg10[%c2, %c0_17] : memref<16x256xf32, #tpu.memory_space<vmem>>, vector<2x256xf32>
    %cst_18 = arith.constant dense<0.000000e+00> : vector<2x256xf32>
    %39 = tpu.matmul %37, %2, %cst_18 {dimension_numbers = #tpu.dot_dimension_numbers<[1], [0], [0], [1], [0, 0, 1, 1], [], []>} : vector<2x64xf32>, vector<64x256xf32>, vector<2x256xf32> -> vector<2x256xf32>
    %40 = arith.addf %38, %39 : vector<2x256xf32>
    %41 = vector.extract_strided_slice %40 {offsets = [0, 0], sizes = [2, 64], strides = [1, 1]} : vector<2x256xf32> to vector<2x64xf32>
    %42 = arith.negf %41 : vector<2x64xf32>
    %43 = math.exp %42 : vector<2x64xf32>
    %cst_19 = arith.constant 1.000000e+00 : f32
    %44 = vector.broadcast %cst_19 : f32 to vector<2x64xf32>
    %45 = arith.addf %44, %43 : vector<2x64xf32>
    %46 = arith.divf %44, %45 : vector<2x64xf32>
    %47 = vector.extract_strided_slice %40 {offsets = [0, 64], sizes = [2, 64], strides = [1, 1]} : vector<2x256xf32> to vector<2x64xf32>
    %48 = arith.negf %47 : vector<2x64xf32>
    %49 = math.exp %48 : vector<2x64xf32>
    %cst_20 = arith.constant 1.000000e+00 : f32
    %50 = vector.broadcast %cst_20 : f32 to vector<2x64xf32>
    %51 = arith.addf %50, %49 : vector<2x64xf32>
    %52 = arith.divf %50, %51 : vector<2x64xf32>
    %53 = vector.extract_strided_slice %40 {offsets = [0, 128], sizes = [2, 64], strides = [1, 1]} : vector<2x256xf32> to vector<2x64xf32>
    %54 = math.tanh %53 : vector<2x64xf32>
    %55 = vector.extract_strided_slice %40 {offsets = [0, 192], sizes = [2, 64], strides = [1, 1]} : vector<2x256xf32> to vector<2x64xf32>
    %56 = arith.negf %55 : vector<2x64xf32>
    %57 = math.exp %56 : vector<2x64xf32>
    %cst_21 = arith.constant 1.000000e+00 : f32
    %58 = vector.broadcast %cst_21 : f32 to vector<2x64xf32>
    %59 = arith.addf %58, %57 : vector<2x64xf32>
    %60 = arith.divf %58, %59 : vector<2x64xf32>
    %61 = arith.mulf %52, %35 : vector<2x64xf32>
    %62 = arith.mulf %46, %54 : vector<2x64xf32>
    %63 = arith.addf %61, %62 : vector<2x64xf32>
    %64 = math.tanh %63 : vector<2x64xf32>
    %65 = arith.mulf %60, %64 : vector<2x64xf32>
    %c4 = arith.constant 4 : index
    %c0_22 = arith.constant 0 : index
    %66 = vector.load %arg10[%c4, %c0_22] : memref<16x256xf32, #tpu.memory_space<vmem>>, vector<2x256xf32>
    %cst_23 = arith.constant dense<0.000000e+00> : vector<2x256xf32>
    %67 = tpu.matmul %65, %2, %cst_23 {dimension_numbers = #tpu.dot_dimension_numbers<[1], [0], [0], [1], [0, 0, 1, 1], [], []>} : vector<2x64xf32>, vector<64x256xf32>, vector<2x256xf32> -> vector<2x256xf32>
    %68 = arith.addf %66, %67 : vector<2x256xf32>
    %69 = vector.extract_strided_slice %68 {offsets = [0, 0], sizes = [2, 64], strides = [1, 1]} : vector<2x256xf32> to vector<2x64xf32>
    %70 = arith.negf %69 : vector<2x64xf32>
    %71 = math.exp %70 : vector<2x64xf32>
    %cst_24 = arith.constant 1.000000e+00 : f32
    %72 = vector.broadcast %cst_24 : f32 to vector<2x64xf32>
    %73 = arith.addf %72, %71 : vector<2x64xf32>
    %74 = arith.divf %72, %73 : vector<2x64xf32>
    %75 = vector.extract_strided_slice %68 {offsets = [0, 64], sizes = [2, 64], strides = [1, 1]} : vector<2x256xf32> to vector<2x64xf32>
    %76 = arith.negf %75 : vector<2x64xf32>
    %77 = math.exp %76 : vector<2x64xf32>
    %cst_25 = arith.constant 1.000000e+00 : f32
    %78 = vector.broadcast %cst_25 : f32 to vector<2x64xf32>
    %79 = arith.addf %78, %77 : vector<2x64xf32>
    %80 = arith.divf %78, %79 : vector<2x64xf32>
    %81 = vector.extract_strided_slice %68 {offsets = [0, 128], sizes = [2, 64], strides = [1, 1]} : vector<2x256xf32> to vector<2x64xf32>
    %82 = math.tanh %81 : vector<2x64xf32>
    %83 = vector.extract_strided_slice %68 {offsets = [0, 192], sizes = [2, 64], strides = [1, 1]} : vector<2x256xf32> to vector<2x64xf32>
    %84 = arith.negf %83 : vector<2x64xf32>
    %85 = math.exp %84 : vector<2x64xf32>
    %cst_26 = arith.constant 1.000000e+00 : f32
    %86 = vector.broadcast %cst_26 : f32 to vector<2x64xf32>
    %87 = arith.addf %86, %85 : vector<2x64xf32>
    %88 = arith.divf %86, %87 : vector<2x64xf32>
    %89 = arith.mulf %80, %63 : vector<2x64xf32>
    %90 = arith.mulf %74, %82 : vector<2x64xf32>
    %91 = arith.addf %89, %90 : vector<2x64xf32>
    %92 = math.tanh %91 : vector<2x64xf32>
    %93 = arith.mulf %88, %92 : vector<2x64xf32>
    %c6 = arith.constant 6 : index
    %c0_27 = arith.constant 0 : index
    %94 = vector.load %arg10[%c6, %c0_27] : memref<16x256xf32, #tpu.memory_space<vmem>>, vector<2x256xf32>
    %cst_28 = arith.constant dense<0.000000e+00> : vector<2x256xf32>
    %95 = tpu.matmul %93, %2, %cst_28 {dimension_numbers = #tpu.dot_dimension_numbers<[1], [0], [0], [1], [0, 0, 1, 1], [], []>} : vector<2x64xf32>, vector<64x256xf32>, vector<2x256xf32> -> vector<2x256xf32>
    %96 = arith.addf %94, %95 : vector<2x256xf32>
    %97 = vector.extract_strided_slice %96 {offsets = [0, 0], sizes = [2, 64], strides = [1, 1]} : vector<2x256xf32> to vector<2x64xf32>
    %98 = arith.negf %97 : vector<2x64xf32>
    %99 = math.exp %98 : vector<2x64xf32>
    %cst_29 = arith.constant 1.000000e+00 : f32
    %100 = vector.broadcast %cst_29 : f32 to vector<2x64xf32>
    %101 = arith.addf %100, %99 : vector<2x64xf32>
    %102 = arith.divf %100, %101 : vector<2x64xf32>
    %103 = vector.extract_strided_slice %96 {offsets = [0, 64], sizes = [2, 64], strides = [1, 1]} : vector<2x256xf32> to vector<2x64xf32>
    %104 = arith.negf %103 : vector<2x64xf32>
    %105 = math.exp %104 : vector<2x64xf32>
    %cst_30 = arith.constant 1.000000e+00 : f32
    %106 = vector.broadcast %cst_30 : f32 to vector<2x64xf32>
    %107 = arith.addf %106, %105 : vector<2x64xf32>
    %108 = arith.divf %106, %107 : vector<2x64xf32>
    %109 = vector.extract_strided_slice %96 {offsets = [0, 128], sizes = [2, 64], strides = [1, 1]} : vector<2x256xf32> to vector<2x64xf32>
    %110 = math.tanh %109 : vector<2x64xf32>
    %111 = vector.extract_strided_slice %96 {offsets = [0, 192], sizes = [2, 64], strides = [1, 1]} : vector<2x256xf32> to vector<2x64xf32>
    %112 = arith.negf %111 : vector<2x64xf32>
    %113 = math.exp %112 : vector<2x64xf32>
    %cst_31 = arith.constant 1.000000e+00 : f32
    %114 = vector.broadcast %cst_31 : f32 to vector<2x64xf32>
    %115 = arith.addf %114, %113 : vector<2x64xf32>
    %116 = arith.divf %114, %115 : vector<2x64xf32>
    %117 = arith.mulf %108, %91 : vector<2x64xf32>
    %118 = arith.mulf %102, %110 : vector<2x64xf32>
    %119 = arith.addf %117, %118 : vector<2x64xf32>
    %120 = math.tanh %119 : vector<2x64xf32>
    %121 = arith.mulf %116, %120 : vector<2x64xf32>
    %c8 = arith.constant 8 : index
    %c0_32 = arith.constant 0 : index
    %122 = vector.load %arg10[%c8, %c0_32] : memref<16x256xf32, #tpu.memory_space<vmem>>, vector<2x256xf32>
    %cst_33 = arith.constant dense<0.000000e+00> : vector<2x256xf32>
    %123 = tpu.matmul %121, %2, %cst_33 {dimension_numbers = #tpu.dot_dimension_numbers<[1], [0], [0], [1], [0, 0, 1, 1], [], []>} : vector<2x64xf32>, vector<64x256xf32>, vector<2x256xf32> -> vector<2x256xf32>
    %124 = arith.addf %122, %123 : vector<2x256xf32>
    %125 = vector.extract_strided_slice %124 {offsets = [0, 0], sizes = [2, 64], strides = [1, 1]} : vector<2x256xf32> to vector<2x64xf32>
    %126 = arith.negf %125 : vector<2x64xf32>
    %127 = math.exp %126 : vector<2x64xf32>
    %cst_34 = arith.constant 1.000000e+00 : f32
    %128 = vector.broadcast %cst_34 : f32 to vector<2x64xf32>
    %129 = arith.addf %128, %127 : vector<2x64xf32>
    %130 = arith.divf %128, %129 : vector<2x64xf32>
    %131 = vector.extract_strided_slice %124 {offsets = [0, 64], sizes = [2, 64], strides = [1, 1]} : vector<2x256xf32> to vector<2x64xf32>
    %132 = arith.negf %131 : vector<2x64xf32>
    %133 = math.exp %132 : vector<2x64xf32>
    %cst_35 = arith.constant 1.000000e+00 : f32
    %134 = vector.broadcast %cst_35 : f32 to vector<2x64xf32>
    %135 = arith.addf %134, %133 : vector<2x64xf32>
    %136 = arith.divf %134, %135 : vector<2x64xf32>
    %137 = vector.extract_strided_slice %124 {offsets = [0, 128], sizes = [2, 64], strides = [1, 1]} : vector<2x256xf32> to vector<2x64xf32>
    %138 = math.tanh %137 : vector<2x64xf32>
    %139 = vector.extract_strided_slice %124 {offsets = [0, 192], sizes = [2, 64], strides = [1, 1]} : vector<2x256xf32> to vector<2x64xf32>
    %140 = arith.negf %139 : vector<2x64xf32>
    %141 = math.exp %140 : vector<2x64xf32>
    %cst_36 = arith.constant 1.000000e+00 : f32
    %142 = vector.broadcast %cst_36 : f32 to vector<2x64xf32>
    %143 = arith.addf %142, %141 : vector<2x64xf32>
    %144 = arith.divf %142, %143 : vector<2x64xf32>
    %145 = arith.mulf %136, %119 : vector<2x64xf32>
    %146 = arith.mulf %130, %138 : vector<2x64xf32>
    %147 = arith.addf %145, %146 : vector<2x64xf32>
    %148 = math.tanh %147 : vector<2x64xf32>
    %149 = arith.mulf %144, %148 : vector<2x64xf32>
    %c10 = arith.constant 10 : index
    %c0_37 = arith.constant 0 : index
    %150 = vector.load %arg10[%c10, %c0_37] : memref<16x256xf32, #tpu.memory_space<vmem>>, vector<2x256xf32>
    %cst_38 = arith.constant dense<0.000000e+00> : vector<2x256xf32>
    %151 = tpu.matmul %149, %2, %cst_38 {dimension_numbers = #tpu.dot_dimension_numbers<[1], [0], [0], [1], [0, 0, 1, 1], [], []>} : vector<2x64xf32>, vector<64x256xf32>, vector<2x256xf32> -> vector<2x256xf32>
    %152 = arith.addf %150, %151 : vector<2x256xf32>
    %153 = vector.extract_strided_slice %152 {offsets = [0, 0], sizes = [2, 64], strides = [1, 1]} : vector<2x256xf32> to vector<2x64xf32>
    %154 = arith.negf %153 : vector<2x64xf32>
    %155 = math.exp %154 : vector<2x64xf32>
    %cst_39 = arith.constant 1.000000e+00 : f32
    %156 = vector.broadcast %cst_39 : f32 to vector<2x64xf32>
    %157 = arith.addf %156, %155 : vector<2x64xf32>
    %158 = arith.divf %156, %157 : vector<2x64xf32>
    %159 = vector.extract_strided_slice %152 {offsets = [0, 64], sizes = [2, 64], strides = [1, 1]} : vector<2x256xf32> to vector<2x64xf32>
    %160 = arith.negf %159 : vector<2x64xf32>
    %161 = math.exp %160 : vector<2x64xf32>
    %cst_40 = arith.constant 1.000000e+00 : f32
    %162 = vector.broadcast %cst_40 : f32 to vector<2x64xf32>
    %163 = arith.addf %162, %161 : vector<2x64xf32>
    %164 = arith.divf %162, %163 : vector<2x64xf32>
    %165 = vector.extract_strided_slice %152 {offsets = [0, 128], sizes = [2, 64], strides = [1, 1]} : vector<2x256xf32> to vector<2x64xf32>
    %166 = math.tanh %165 : vector<2x64xf32>
    %167 = vector.extract_strided_slice %152 {offsets = [0, 192], sizes = [2, 64], strides = [1, 1]} : vector<2x256xf32> to vector<2x64xf32>
    %168 = arith.negf %167 : vector<2x64xf32>
    %169 = math.exp %168 : vector<2x64xf32>
    %cst_41 = arith.constant 1.000000e+00 : f32
    %170 = vector.broadcast %cst_41 : f32 to vector<2x64xf32>
    %171 = arith.addf %170, %169 : vector<2x64xf32>
    %172 = arith.divf %170, %171 : vector<2x64xf32>
    %173 = arith.mulf %164, %147 : vector<2x64xf32>
    %174 = arith.mulf %158, %166 : vector<2x64xf32>
    %175 = arith.addf %173, %174 : vector<2x64xf32>
    %176 = math.tanh %175 : vector<2x64xf32>
    %177 = arith.mulf %172, %176 : vector<2x64xf32>
    %c12 = arith.constant 12 : index
    %c0_42 = arith.constant 0 : index
    %178 = vector.load %arg10[%c12, %c0_42] : memref<16x256xf32, #tpu.memory_space<vmem>>, vector<2x256xf32>
    %cst_43 = arith.constant dense<0.000000e+00> : vector<2x256xf32>
    %179 = tpu.matmul %177, %2, %cst_43 {dimension_numbers = #tpu.dot_dimension_numbers<[1], [0], [0], [1], [0, 0, 1, 1], [], []>} : vector<2x64xf32>, vector<64x256xf32>, vector<2x256xf32> -> vector<2x256xf32>
    %180 = arith.addf %178, %179 : vector<2x256xf32>
    %181 = vector.extract_strided_slice %180 {offsets = [0, 0], sizes = [2, 64], strides = [1, 1]} : vector<2x256xf32> to vector<2x64xf32>
    %182 = arith.negf %181 : vector<2x64xf32>
    %183 = math.exp %182 : vector<2x64xf32>
    %cst_44 = arith.constant 1.000000e+00 : f32
    %184 = vector.broadcast %cst_44 : f32 to vector<2x64xf32>
    %185 = arith.addf %184, %183 : vector<2x64xf32>
    %186 = arith.divf %184, %185 : vector<2x64xf32>
    %187 = vector.extract_strided_slice %180 {offsets = [0, 64], sizes = [2, 64], strides = [1, 1]} : vector<2x256xf32> to vector<2x64xf32>
    %188 = arith.negf %187 : vector<2x64xf32>
    %189 = math.exp %188 : vector<2x64xf32>
    %cst_45 = arith.constant 1.000000e+00 : f32
    %190 = vector.broadcast %cst_45 : f32 to vector<2x64xf32>
    %191 = arith.addf %190, %189 : vector<2x64xf32>
    %192 = arith.divf %190, %191 : vector<2x64xf32>
    %193 = vector.extract_strided_slice %180 {offsets = [0, 128], sizes = [2, 64], strides = [1, 1]} : vector<2x256xf32> to vector<2x64xf32>
    %194 = math.tanh %193 : vector<2x64xf32>
    %195 = vector.extract_strided_slice %180 {offsets = [0, 192], sizes = [2, 64], strides = [1, 1]} : vector<2x256xf32> to vector<2x64xf32>
    %196 = arith.negf %195 : vector<2x64xf32>
    %197 = math.exp %196 : vector<2x64xf32>
    %cst_46 = arith.constant 1.000000e+00 : f32
    %198 = vector.broadcast %cst_46 : f32 to vector<2x64xf32>
    %199 = arith.addf %198, %197 : vector<2x64xf32>
    %200 = arith.divf %198, %199 : vector<2x64xf32>
    %201 = arith.mulf %192, %175 : vector<2x64xf32>
    %202 = arith.mulf %186, %194 : vector<2x64xf32>
    %203 = arith.addf %201, %202 : vector<2x64xf32>
    %204 = math.tanh %203 : vector<2x64xf32>
    %205 = arith.mulf %200, %204 : vector<2x64xf32>
    %c14 = arith.constant 14 : index
    %c0_47 = arith.constant 0 : index
    %206 = vector.load %arg10[%c14, %c0_47] : memref<16x256xf32, #tpu.memory_space<vmem>>, vector<2x256xf32>
    %cst_48 = arith.constant dense<0.000000e+00> : vector<2x256xf32>
    %207 = tpu.matmul %205, %2, %cst_48 {dimension_numbers = #tpu.dot_dimension_numbers<[1], [0], [0], [1], [0, 0, 1, 1], [], []>} : vector<2x64xf32>, vector<64x256xf32>, vector<2x256xf32> -> vector<2x256xf32>
    %208 = arith.addf %206, %207 : vector<2x256xf32>
    %209 = vector.extract_strided_slice %208 {offsets = [0, 0], sizes = [2, 64], strides = [1, 1]} : vector<2x256xf32> to vector<2x64xf32>
    %210 = arith.negf %209 : vector<2x64xf32>
    %211 = math.exp %210 : vector<2x64xf32>
    %cst_49 = arith.constant 1.000000e+00 : f32
    %212 = vector.broadcast %cst_49 : f32 to vector<2x64xf32>
    %213 = arith.addf %212, %211 : vector<2x64xf32>
    %214 = arith.divf %212, %213 : vector<2x64xf32>
    %215 = vector.extract_strided_slice %208 {offsets = [0, 64], sizes = [2, 64], strides = [1, 1]} : vector<2x256xf32> to vector<2x64xf32>
    %216 = arith.negf %215 : vector<2x64xf32>
    %217 = math.exp %216 : vector<2x64xf32>
    %cst_50 = arith.constant 1.000000e+00 : f32
    %218 = vector.broadcast %cst_50 : f32 to vector<2x64xf32>
    %219 = arith.addf %218, %217 : vector<2x64xf32>
    %220 = arith.divf %218, %219 : vector<2x64xf32>
    %221 = vector.extract_strided_slice %208 {offsets = [0, 128], sizes = [2, 64], strides = [1, 1]} : vector<2x256xf32> to vector<2x64xf32>
    %222 = math.tanh %221 : vector<2x64xf32>
    %223 = vector.extract_strided_slice %208 {offsets = [0, 192], sizes = [2, 64], strides = [1, 1]} : vector<2x256xf32> to vector<2x64xf32>
    %224 = arith.negf %223 : vector<2x64xf32>
    %225 = math.exp %224 : vector<2x64xf32>
    %cst_51 = arith.constant 1.000000e+00 : f32
    %226 = vector.broadcast %cst_51 : f32 to vector<2x64xf32>
    %227 = arith.addf %226, %225 : vector<2x64xf32>
    %228 = arith.divf %226, %227 : vector<2x64xf32>
    %229 = arith.mulf %220, %203 : vector<2x64xf32>
    %230 = arith.mulf %214, %222 : vector<2x64xf32>
    %231 = arith.addf %229, %230 : vector<2x64xf32>
    %232 = math.tanh %231 : vector<2x64xf32>
    %233 = arith.mulf %228, %232 : vector<2x64xf32>
    %234 = tpu.concatenate %37, %233 in 1 : vector<2x64xf32>, vector<2x64xf32> -> vector<2x128xf32>
    %235 = tpu.concatenate %65, %205 in 1 : vector<2x64xf32>, vector<2x64xf32> -> vector<2x128xf32>
    %236 = tpu.concatenate %93, %177 in 1 : vector<2x64xf32>, vector<2x64xf32> -> vector<2x128xf32>
    %237 = tpu.concatenate %121, %149 in 1 : vector<2x64xf32>, vector<2x64xf32> -> vector<2x128xf32>
    %238 = tpu.concatenate %149, %121 in 1 : vector<2x64xf32>, vector<2x64xf32> -> vector<2x128xf32>
    %239 = tpu.concatenate %177, %93 in 1 : vector<2x64xf32>, vector<2x64xf32> -> vector<2x128xf32>
    %240 = tpu.concatenate %205, %65 in 1 : vector<2x64xf32>, vector<2x64xf32> -> vector<2x128xf32>
    %241 = tpu.concatenate %233, %37 in 1 : vector<2x64xf32>, vector<2x64xf32> -> vector<2x128xf32>
    %242 = tpu.concatenate %234, %235, %236, %237, %238, %239, %240, %241 in 0 : vector<2x128xf32>, vector<2x128xf32>, vector<2x128xf32>, vector<2x128xf32>, vector<2x128xf32>, vector<2x128xf32>, vector<2x128xf32>, vector<2x128xf32> -> vector<16x128xf32>
    %c0_52 = arith.constant 0 : index
    %c0_53 = arith.constant 0 : index
    %243 = vector.load %arg4[%c0_52, %c0_53] : memref<128x256xf32, #tpu.memory_space<vmem>>, vector<128x256xf32>
    %c0_54 = arith.constant 0 : index
    %c0_55 = arith.constant 0 : index
    %244 = vector.load %arg5[%c0_54, %c0_55] : memref<64x256xf32, #tpu.memory_space<vmem>>, vector<64x256xf32>
    %c0_56 = arith.constant 0 : index
    %c0_57 = arith.constant 0 : index
    %245 = vector.load %arg6[%c0_56, %c0_57] : memref<1x256xf32, #tpu.memory_space<vmem>>, vector<1x256xf32>
    %cst_58 = arith.constant dense<0.000000e+00> : vector<16x256xf32>
    %246 = tpu.matmul %242, %243, %cst_58 {dimension_numbers = #tpu.dot_dimension_numbers<[1], [0], [0], [1], [0, 0, 1, 1], [], []>} : vector<16x128xf32>, vector<128x256xf32>, vector<16x256xf32> -> vector<16x256xf32>
    %247 = vector.broadcast %245 : vector<1x256xf32> to vector<16x256xf32>
    %248 = arith.addf %246, %247 : vector<16x256xf32>
    %c0_59 = arith.constant 0 : index
    %c0_60 = arith.constant 0 : index
    %249 = vector.load %arg10[%c0_59, %c0_60] : memref<16x256xf32, #tpu.memory_space<vmem>>, vector<16x256xf32>
    tpu.vector_store %arg10[%c0_59, %c0_60], %248 {strides = array<i32>} : memref<16x256xf32, #tpu.memory_space<vmem>>, vector<16x256xf32>,
    %cst_61 = arith.constant 0.000000e+00 : f32
    %250 = vector.broadcast %cst_61 : f32 to vector<2x64xf32>
    %cst_62 = arith.constant 0.000000e+00 : f32
    %251 = vector.broadcast %cst_62 : f32 to vector<2x64xf32>
    %c0_63 = arith.constant 0 : index
    %c0_64 = arith.constant 0 : index
    %252 = vector.load %arg10[%c0_63, %c0_64] : memref<16x256xf32, #tpu.memory_space<vmem>>, vector<2x256xf32>
    %cst_65 = arith.constant dense<0.000000e+00> : vector<2x256xf32>
    %253 = tpu.matmul %250, %244, %cst_65 {dimension_numbers = #tpu.dot_dimension_numbers<[1], [0], [0], [1], [0, 0, 1, 1], [], []>} : vector<2x64xf32>, vector<64x256xf32>, vector<2x256xf32> -> vector<2x256xf32>
    %254 = arith.addf %252, %253 : vector<2x256xf32>
    %255 = vector.extract_strided_slice %254 {offsets = [0, 0], sizes = [2, 64], strides = [1, 1]} : vector<2x256xf32> to vector<2x64xf32>
    %256 = arith.negf %255 : vector<2x64xf32>
    %257 = math.exp %256 : vector<2x64xf32>
    %cst_66 = arith.constant 1.000000e+00 : f32
    %258 = vector.broadcast %cst_66 : f32 to vector<2x64xf32>
    %259 = arith.addf %258, %257 : vector<2x64xf32>
    %260 = arith.divf %258, %259 : vector<2x64xf32>
    %261 = vector.extract_strided_slice %254 {offsets = [0, 64], sizes = [2, 64], strides = [1, 1]} : vector<2x256xf32> to vector<2x64xf32>
    %262 = arith.negf %261 : vector<2x64xf32>
    %263 = math.exp %262 : vector<2x64xf32>
    %cst_67 = arith.constant 1.000000e+00 : f32
    %264 = vector.broadcast %cst_67 : f32 to vector<2x64xf32>
    %265 = arith.addf %264, %263 : vector<2x64xf32>
    %266 = arith.divf %264, %265 : vector<2x64xf32>
    %267 = vector.extract_strided_slice %254 {offsets = [0, 128], sizes = [2, 64], strides = [1, 1]} : vector<2x256xf32> to vector<2x64xf32>
    %268 = math.tanh %267 : vector<2x64xf32>
    %269 = vector.extract_strided_slice %254 {offsets = [0, 192], sizes = [2, 64], strides = [1, 1]} : vector<2x256xf32> to vector<2x64xf32>
    %270 = arith.negf %269 : vector<2x64xf32>
    %271 = math.exp %270 : vector<2x64xf32>
    %cst_68 = arith.constant 1.000000e+00 : f32
    %272 = vector.broadcast %cst_68 : f32 to vector<2x64xf32>
    %273 = arith.addf %272, %271 : vector<2x64xf32>
    %274 = arith.divf %272, %273 : vector<2x64xf32>
    %275 = arith.mulf %266, %251 : vector<2x64xf32>
    %276 = arith.mulf %260, %268 : vector<2x64xf32>
    %277 = arith.addf %275, %276 : vector<2x64xf32>
    %278 = math.tanh %277 : vector<2x64xf32>
    %279 = arith.mulf %274, %278 : vector<2x64xf32>
    %c2_69 = arith.constant 2 : index
    %c0_70 = arith.constant 0 : index
    %280 = vector.load %arg10[%c2_69, %c0_70] : memref<16x256xf32, #tpu.memory_space<vmem>>, vector<2x256xf32>
    %cst_71 = arith.constant dense<0.000000e+00> : vector<2x256xf32>
    %281 = tpu.matmul %279, %244, %cst_71 {dimension_numbers = #tpu.dot_dimension_numbers<[1], [0], [0], [1], [0, 0, 1, 1], [], []>} : vector<2x64xf32>, vector<64x256xf32>, vector<2x256xf32> -> vector<2x256xf32>
    %282 = arith.addf %280, %281 : vector<2x256xf32>
    %283 = vector.extract_strided_slice %282 {offsets = [0, 0], sizes = [2, 64], strides = [1, 1]} : vector<2x256xf32> to vector<2x64xf32>
    %284 = arith.negf %283 : vector<2x64xf32>
    %285 = math.exp %284 : vector<2x64xf32>
    %cst_72 = arith.constant 1.000000e+00 : f32
    %286 = vector.broadcast %cst_72 : f32 to vector<2x64xf32>
    %287 = arith.addf %286, %285 : vector<2x64xf32>
    %288 = arith.divf %286, %287 : vector<2x64xf32>
    %289 = vector.extract_strided_slice %282 {offsets = [0, 64], sizes = [2, 64], strides = [1, 1]} : vector<2x256xf32> to vector<2x64xf32>
    %290 = arith.negf %289 : vector<2x64xf32>
    %291 = math.exp %290 : vector<2x64xf32>
    %cst_73 = arith.constant 1.000000e+00 : f32
    %292 = vector.broadcast %cst_73 : f32 to vector<2x64xf32>
    %293 = arith.addf %292, %291 : vector<2x64xf32>
    %294 = arith.divf %292, %293 : vector<2x64xf32>
    %295 = vector.extract_strided_slice %282 {offsets = [0, 128], sizes = [2, 64], strides = [1, 1]} : vector<2x256xf32> to vector<2x64xf32>
    %296 = math.tanh %295 : vector<2x64xf32>
    %297 = vector.extract_strided_slice %282 {offsets = [0, 192], sizes = [2, 64], strides = [1, 1]} : vector<2x256xf32> to vector<2x64xf32>
    %298 = arith.negf %297 : vector<2x64xf32>
    %299 = math.exp %298 : vector<2x64xf32>
    %cst_74 = arith.constant 1.000000e+00 : f32
    %300 = vector.broadcast %cst_74 : f32 to vector<2x64xf32>
    %301 = arith.addf %300, %299 : vector<2x64xf32>
    %302 = arith.divf %300, %301 : vector<2x64xf32>
    %303 = arith.mulf %294, %277 : vector<2x64xf32>
    %304 = arith.mulf %288, %296 : vector<2x64xf32>
    %305 = arith.addf %303, %304 : vector<2x64xf32>
    %306 = math.tanh %305 : vector<2x64xf32>
    %307 = arith.mulf %302, %306 : vector<2x64xf32>
    %c4_75 = arith.constant 4 : index
    %c0_76 = arith.constant 0 : index
    %308 = vector.load %arg10[%c4_75, %c0_76] : memref<16x256xf32, #tpu.memory_space<vmem>>, vector<2x256xf32>
    %cst_77 = arith.constant dense<0.000000e+00> : vector<2x256xf32>
    %309 = tpu.matmul %307, %244, %cst_77 {dimension_numbers = #tpu.dot_dimension_numbers<[1], [0], [0], [1], [0, 0, 1, 1], [], []>} : vector<2x64xf32>, vector<64x256xf32>, vector<2x256xf32> -> vector<2x256xf32>
    %310 = arith.addf %308, %309 : vector<2x256xf32>
    %311 = vector.extract_strided_slice %310 {offsets = [0, 0], sizes = [2, 64], strides = [1, 1]} : vector<2x256xf32> to vector<2x64xf32>
    %312 = arith.negf %311 : vector<2x64xf32>
    %313 = math.exp %312 : vector<2x64xf32>
    %cst_78 = arith.constant 1.000000e+00 : f32
    %314 = vector.broadcast %cst_78 : f32 to vector<2x64xf32>
    %315 = arith.addf %314, %313 : vector<2x64xf32>
    %316 = arith.divf %314, %315 : vector<2x64xf32>
    %317 = vector.extract_strided_slice %310 {offsets = [0, 64], sizes = [2, 64], strides = [1, 1]} : vector<2x256xf32> to vector<2x64xf32>
    %318 = arith.negf %317 : vector<2x64xf32>
    %319 = math.exp %318 : vector<2x64xf32>
    %cst_79 = arith.constant 1.000000e+00 : f32
    %320 = vector.broadcast %cst_79 : f32 to vector<2x64xf32>
    %321 = arith.addf %320, %319 : vector<2x64xf32>
    %322 = arith.divf %320, %321 : vector<2x64xf32>
    %323 = vector.extract_strided_slice %310 {offsets = [0, 128], sizes = [2, 64], strides = [1, 1]} : vector<2x256xf32> to vector<2x64xf32>
    %324 = math.tanh %323 : vector<2x64xf32>
    %325 = vector.extract_strided_slice %310 {offsets = [0, 192], sizes = [2, 64], strides = [1, 1]} : vector<2x256xf32> to vector<2x64xf32>
    %326 = arith.negf %325 : vector<2x64xf32>
    %327 = math.exp %326 : vector<2x64xf32>
    %cst_80 = arith.constant 1.000000e+00 : f32
    %328 = vector.broadcast %cst_80 : f32 to vector<2x64xf32>
    %329 = arith.addf %328, %327 : vector<2x64xf32>
    %330 = arith.divf %328, %329 : vector<2x64xf32>
    %331 = arith.mulf %322, %305 : vector<2x64xf32>
    %332 = arith.mulf %316, %324 : vector<2x64xf32>
    %333 = arith.addf %331, %332 : vector<2x64xf32>
    %334 = math.tanh %333 : vector<2x64xf32>
    %335 = arith.mulf %330, %334 : vector<2x64xf32>
    %c6_81 = arith.constant 6 : index
    %c0_82 = arith.constant 0 : index
    %336 = vector.load %arg10[%c6_81, %c0_82] : memref<16x256xf32, #tpu.memory_space<vmem>>, vector<2x256xf32>
    %cst_83 = arith.constant dense<0.000000e+00> : vector<2x256xf32>
    %337 = tpu.matmul %335, %244, %cst_83 {dimension_numbers = #tpu.dot_dimension_numbers<[1], [0], [0], [1], [0, 0, 1, 1], [], []>} : vector<2x64xf32>, vector<64x256xf32>, vector<2x256xf32> -> vector<2x256xf32>
    %338 = arith.addf %336, %337 : vector<2x256xf32>
    %339 = vector.extract_strided_slice %338 {offsets = [0, 0], sizes = [2, 64], strides = [1, 1]} : vector<2x256xf32> to vector<2x64xf32>
    %340 = arith.negf %339 : vector<2x64xf32>
    %341 = math.exp %340 : vector<2x64xf32>
    %cst_84 = arith.constant 1.000000e+00 : f32
    %342 = vector.broadcast %cst_84 : f32 to vector<2x64xf32>
    %343 = arith.addf %342, %341 : vector<2x64xf32>
    %344 = arith.divf %342, %343 : vector<2x64xf32>
    %345 = vector.extract_strided_slice %338 {offsets = [0, 64], sizes = [2, 64], strides = [1, 1]} : vector<2x256xf32> to vector<2x64xf32>
    %346 = arith.negf %345 : vector<2x64xf32>
    %347 = math.exp %346 : vector<2x64xf32>
    %cst_85 = arith.constant 1.000000e+00 : f32
    %348 = vector.broadcast %cst_85 : f32 to vector<2x64xf32>
    %349 = arith.addf %348, %347 : vector<2x64xf32>
    %350 = arith.divf %348, %349 : vector<2x64xf32>
    %351 = vector.extract_strided_slice %338 {offsets = [0, 128], sizes = [2, 64], strides = [1, 1]} : vector<2x256xf32> to vector<2x64xf32>
    %352 = math.tanh %351 : vector<2x64xf32>
    %353 = vector.extract_strided_slice %338 {offsets = [0, 192], sizes = [2, 64], strides = [1, 1]} : vector<2x256xf32> to vector<2x64xf32>
    %354 = arith.negf %353 : vector<2x64xf32>
    %355 = math.exp %354 : vector<2x64xf32>
    %cst_86 = arith.constant 1.000000e+00 : f32
    %356 = vector.broadcast %cst_86 : f32 to vector<2x64xf32>
    %357 = arith.addf %356, %355 : vector<2x64xf32>
    %358 = arith.divf %356, %357 : vector<2x64xf32>
    %359 = arith.mulf %350, %333 : vector<2x64xf32>
    %360 = arith.mulf %344, %352 : vector<2x64xf32>
    %361 = arith.addf %359, %360 : vector<2x64xf32>
    %362 = math.tanh %361 : vector<2x64xf32>
    %363 = arith.mulf %358, %362 : vector<2x64xf32>
    %c8_87 = arith.constant 8 : index
    %c0_88 = arith.constant 0 : index
    %364 = vector.load %arg10[%c8_87, %c0_88] : memref<16x256xf32, #tpu.memory_space<vmem>>, vector<2x256xf32>
    %cst_89 = arith.constant dense<0.000000e+00> : vector<2x256xf32>
    %365 = tpu.matmul %363, %244, %cst_89 {dimension_numbers = #tpu.dot_dimension_numbers<[1], [0], [0], [1], [0, 0, 1, 1], [], []>} : vector<2x64xf32>, vector<64x256xf32>, vector<2x256xf32> -> vector<2x256xf32>
    %366 = arith.addf %364, %365 : vector<2x256xf32>
    %367 = vector.extract_strided_slice %366 {offsets = [0, 0], sizes = [2, 64], strides = [1, 1]} : vector<2x256xf32> to vector<2x64xf32>
    %368 = arith.negf %367 : vector<2x64xf32>
    %369 = math.exp %368 : vector<2x64xf32>
    %cst_90 = arith.constant 1.000000e+00 : f32
    %370 = vector.broadcast %cst_90 : f32 to vector<2x64xf32>
    %371 = arith.addf %370, %369 : vector<2x64xf32>
    %372 = arith.divf %370, %371 : vector<2x64xf32>
    %373 = vector.extract_strided_slice %366 {offsets = [0, 64], sizes = [2, 64], strides = [1, 1]} : vector<2x256xf32> to vector<2x64xf32>
    %374 = arith.negf %373 : vector<2x64xf32>
    %375 = math.exp %374 : vector<2x64xf32>
    %cst_91 = arith.constant 1.000000e+00 : f32
    %376 = vector.broadcast %cst_91 : f32 to vector<2x64xf32>
    %377 = arith.addf %376, %375 : vector<2x64xf32>
    %378 = arith.divf %376, %377 : vector<2x64xf32>
    %379 = vector.extract_strided_slice %366 {offsets = [0, 128], sizes = [2, 64], strides = [1, 1]} : vector<2x256xf32> to vector<2x64xf32>
    %380 = math.tanh %379 : vector<2x64xf32>
    %381 = vector.extract_strided_slice %366 {offsets = [0, 192], sizes = [2, 64], strides = [1, 1]} : vector<2x256xf32> to vector<2x64xf32>
    %382 = arith.negf %381 : vector<2x64xf32>
    %383 = math.exp %382 : vector<2x64xf32>
    %cst_92 = arith.constant 1.000000e+00 : f32
    %384 = vector.broadcast %cst_92 : f32 to vector<2x64xf32>
    %385 = arith.addf %384, %383 : vector<2x64xf32>
    %386 = arith.divf %384, %385 : vector<2x64xf32>
    %387 = arith.mulf %378, %361 : vector<2x64xf32>
    %388 = arith.mulf %372, %380 : vector<2x64xf32>
    %389 = arith.addf %387, %388 : vector<2x64xf32>
    %390 = math.tanh %389 : vector<2x64xf32>
    %391 = arith.mulf %386, %390 : vector<2x64xf32>
    %c10_93 = arith.constant 10 : index
    %c0_94 = arith.constant 0 : index
    %392 = vector.load %arg10[%c10_93, %c0_94] : memref<16x256xf32, #tpu.memory_space<vmem>>, vector<2x256xf32>
    %cst_95 = arith.constant dense<0.000000e+00> : vector<2x256xf32>
    %393 = tpu.matmul %391, %244, %cst_95 {dimension_numbers = #tpu.dot_dimension_numbers<[1], [0], [0], [1], [0, 0, 1, 1], [], []>} : vector<2x64xf32>, vector<64x256xf32>, vector<2x256xf32> -> vector<2x256xf32>
    %394 = arith.addf %392, %393 : vector<2x256xf32>
    %395 = vector.extract_strided_slice %394 {offsets = [0, 0], sizes = [2, 64], strides = [1, 1]} : vector<2x256xf32> to vector<2x64xf32>
    %396 = arith.negf %395 : vector<2x64xf32>
    %397 = math.exp %396 : vector<2x64xf32>
    %cst_96 = arith.constant 1.000000e+00 : f32
    %398 = vector.broadcast %cst_96 : f32 to vector<2x64xf32>
    %399 = arith.addf %398, %397 : vector<2x64xf32>
    %400 = arith.divf %398, %399 : vector<2x64xf32>
    %401 = vector.extract_strided_slice %394 {offsets = [0, 64], sizes = [2, 64], strides = [1, 1]} : vector<2x256xf32> to vector<2x64xf32>
    %402 = arith.negf %401 : vector<2x64xf32>
    %403 = math.exp %402 : vector<2x64xf32>
    %cst_97 = arith.constant 1.000000e+00 : f32
    %404 = vector.broadcast %cst_97 : f32 to vector<2x64xf32>
    %405 = arith.addf %404, %403 : vector<2x64xf32>
    %406 = arith.divf %404, %405 : vector<2x64xf32>
    %407 = vector.extract_strided_slice %394 {offsets = [0, 128], sizes = [2, 64], strides = [1, 1]} : vector<2x256xf32> to vector<2x64xf32>
    %408 = math.tanh %407 : vector<2x64xf32>
    %409 = vector.extract_strided_slice %394 {offsets = [0, 192], sizes = [2, 64], strides = [1, 1]} : vector<2x256xf32> to vector<2x64xf32>
    %410 = arith.negf %409 : vector<2x64xf32>
    %411 = math.exp %410 : vector<2x64xf32>
    %cst_98 = arith.constant 1.000000e+00 : f32
    %412 = vector.broadcast %cst_98 : f32 to vector<2x64xf32>
    %413 = arith.addf %412, %411 : vector<2x64xf32>
    %414 = arith.divf %412, %413 : vector<2x64xf32>
    %415 = arith.mulf %406, %389 : vector<2x64xf32>
    %416 = arith.mulf %400, %408 : vector<2x64xf32>
    %417 = arith.addf %415, %416 : vector<2x64xf32>
    %418 = math.tanh %417 : vector<2x64xf32>
    %419 = arith.mulf %414, %418 : vector<2x64xf32>
    %c12_99 = arith.constant 12 : index
    %c0_100 = arith.constant 0 : index
    %420 = vector.load %arg10[%c12_99, %c0_100] : memref<16x256xf32, #tpu.memory_space<vmem>>, vector<2x256xf32>
    %cst_101 = arith.constant dense<0.000000e+00> : vector<2x256xf32>
    %421 = tpu.matmul %419, %244, %cst_101 {dimension_numbers = #tpu.dot_dimension_numbers<[1], [0], [0], [1], [0, 0, 1, 1], [], []>} : vector<2x64xf32>, vector<64x256xf32>, vector<2x256xf32> -> vector<2x256xf32>
    %422 = arith.addf %420, %421 : vector<2x256xf32>
    %423 = vector.extract_strided_slice %422 {offsets = [0, 0], sizes = [2, 64], strides = [1, 1]} : vector<2x256xf32> to vector<2x64xf32>
    %424 = arith.negf %423 : vector<2x64xf32>
    %425 = math.exp %424 : vector<2x64xf32>
    %cst_102 = arith.constant 1.000000e+00 : f32
    %426 = vector.broadcast %cst_102 : f32 to vector<2x64xf32>
    %427 = arith.addf %426, %425 : vector<2x64xf32>
    %428 = arith.divf %426, %427 : vector<2x64xf32>
    %429 = vector.extract_strided_slice %422 {offsets = [0, 64], sizes = [2, 64], strides = [1, 1]} : vector<2x256xf32> to vector<2x64xf32>
    %430 = arith.negf %429 : vector<2x64xf32>
    %431 = math.exp %430 : vector<2x64xf32>
    %cst_103 = arith.constant 1.000000e+00 : f32
    %432 = vector.broadcast %cst_103 : f32 to vector<2x64xf32>
    %433 = arith.addf %432, %431 : vector<2x64xf32>
    %434 = arith.divf %432, %433 : vector<2x64xf32>
    %435 = vector.extract_strided_slice %422 {offsets = [0, 128], sizes = [2, 64], strides = [1, 1]} : vector<2x256xf32> to vector<2x64xf32>
    %436 = math.tanh %435 : vector<2x64xf32>
    %437 = vector.extract_strided_slice %422 {offsets = [0, 192], sizes = [2, 64], strides = [1, 1]} : vector<2x256xf32> to vector<2x64xf32>
    %438 = arith.negf %437 : vector<2x64xf32>
    %439 = math.exp %438 : vector<2x64xf32>
    %cst_104 = arith.constant 1.000000e+00 : f32
    %440 = vector.broadcast %cst_104 : f32 to vector<2x64xf32>
    %441 = arith.addf %440, %439 : vector<2x64xf32>
    %442 = arith.divf %440, %441 : vector<2x64xf32>
    %443 = arith.mulf %434, %417 : vector<2x64xf32>
    %444 = arith.mulf %428, %436 : vector<2x64xf32>
    %445 = arith.addf %443, %444 : vector<2x64xf32>
    %446 = math.tanh %445 : vector<2x64xf32>
    %447 = arith.mulf %442, %446 : vector<2x64xf32>
    %c14_105 = arith.constant 14 : index
    %c0_106 = arith.constant 0 : index
    %448 = vector.load %arg10[%c14_105, %c0_106] : memref<16x256xf32, #tpu.memory_space<vmem>>, vector<2x256xf32>
    %cst_107 = arith.constant dense<0.000000e+00> : vector<2x256xf32>
    %449 = tpu.matmul %447, %244, %cst_107 {dimension_numbers = #tpu.dot_dimension_numbers<[1], [0], [0], [1], [0, 0, 1, 1], [], []>} : vector<2x64xf32>, vector<64x256xf32>, vector<2x256xf32> -> vector<2x256xf32>
    %450 = arith.addf %448, %449 : vector<2x256xf32>
    %451 = vector.extract_strided_slice %450 {offsets = [0, 0], sizes = [2, 64], strides = [1, 1]} : vector<2x256xf32> to vector<2x64xf32>
    %452 = arith.negf %451 : vector<2x64xf32>
    %453 = math.exp %452 : vector<2x64xf32>
    %cst_108 = arith.constant 1.000000e+00 : f32
    %454 = vector.broadcast %cst_108 : f32 to vector<2x64xf32>
    %455 = arith.addf %454, %453 : vector<2x64xf32>
    %456 = arith.divf %454, %455 : vector<2x64xf32>
    %457 = vector.extract_strided_slice %450 {offsets = [0, 64], sizes = [2, 64], strides = [1, 1]} : vector<2x256xf32> to vector<2x64xf32>
    %458 = arith.negf %457 : vector<2x64xf32>
    %459 = math.exp %458 : vector<2x64xf32>
    %cst_109 = arith.constant 1.000000e+00 : f32
    %460 = vector.broadcast %cst_109 : f32 to vector<2x64xf32>
    %461 = arith.addf %460, %459 : vector<2x64xf32>
    %462 = arith.divf %460, %461 : vector<2x64xf32>
    %463 = vector.extract_strided_slice %450 {offsets = [0, 128], sizes = [2, 64], strides = [1, 1]} : vector<2x256xf32> to vector<2x64xf32>
    %464 = math.tanh %463 : vector<2x64xf32>
    %465 = vector.extract_strided_slice %450 {offsets = [0, 192], sizes = [2, 64], strides = [1, 1]} : vector<2x256xf32> to vector<2x64xf32>
    %466 = arith.negf %465 : vector<2x64xf32>
    %467 = math.exp %466 : vector<2x64xf32>
    %cst_110 = arith.constant 1.000000e+00 : f32
    %468 = vector.broadcast %cst_110 : f32 to vector<2x64xf32>
    %469 = arith.addf %468, %467 : vector<2x64xf32>
    %470 = arith.divf %468, %469 : vector<2x64xf32>
    %471 = arith.mulf %462, %445 : vector<2x64xf32>
    %472 = arith.mulf %456, %464 : vector<2x64xf32>
    %473 = arith.addf %471, %472 : vector<2x64xf32>
    %474 = math.tanh %473 : vector<2x64xf32>
    %475 = arith.mulf %470, %474 : vector<2x64xf32>
    %476 = tpu.concatenate %475, %279 in 1 : vector<2x64xf32>, vector<2x64xf32> -> vector<2x128xf32>
    %c0_111 = arith.constant 0 : index
    %c0_112 = arith.constant 0 : index
    %477 = vector.load %arg7[%c0_111, %c0_112] : memref<128x8xf32, #tpu.memory_space<vmem>>, vector<128x8xf32>
    %cst_113 = arith.constant dense<0.000000e+00> : vector<2x8xf32>
    %478 = tpu.matmul %476, %477, %cst_113 {dimension_numbers = #tpu.dot_dimension_numbers<[1], [0], [0], [1], [0, 0, 1, 1], [], []>} : vector<2x128xf32>, vector<128x8xf32>, vector<2x8xf32> -> vector<2x8xf32>
    %c0_114 = arith.constant 0 : index
    %c0_115 = arith.constant 0 : index
    %479 = vector.load %arg8[%c0_114, %c0_115] : memref<1x8xf32, #tpu.memory_space<vmem>>, vector<1x8xf32>
    %480 = vector.broadcast %479 : vector<1x8xf32> to vector<2x8xf32>
    %481 = arith.addf %478, %480 : vector<2x8xf32>
    %c0_116 = arith.constant 0 : index
    %c0_117 = arith.constant 0 : index
    %482 = vector.load %arg9[%c0_116, %c0_117] : memref<2x8xf32, #tpu.memory_space<vmem>>, vector<2x8xf32>
    tpu.vector_store %arg9[%c0_116, %c0_117], %481 {strides = array<i32>} : memref<2x8xf32, #tpu.memory_space<vmem>>, vector<2x8xf32>,
    return
  }
}

</mosaic_0001>

<llo_original>
// kernel: bilstm_forward.1
$region0: #{bilstm_forward.1}
  #allocation0 [shape = 'u32[]', space=smem, size = 0x4, offset = 0x4, fixed_abs, tag = 'smem constant byte address 0x4 - core index']
  #allocation1 [shape = 'u32[72,128]{1,0:T(1,128)}', space=vmem, size = 0x9000, scoped, tag = 'internal scratch']
  #allocation2 [shape = 'f32[16,256]{1,0:T(8,128)}', space=vmem, size = 0x4000, scoped, tag = 'scratch operand']
  %s0 = inlined_call_operand.vmem [shape: f32[16,32], index: 0, kind: input, shape index: {}]
  %s1 = inlined_call_operand.vmem [shape: f32[32,256], index: 1, kind: input, shape index: {}]
  %s2 = inlined_call_operand.vmem [shape: f32[64,256], index: 2, kind: input, shape index: {}]
  %s3 = inlined_call_operand.vmem [shape: f32[1,256], index: 3, kind: input, shape index: {}]
  %s4 = inlined_call_operand.hbm [shape: f32[128,256], index: 4, kind: input, shape index: {}]
  %s5 = inlined_call_operand.hbm [shape: f32[64,256], index: 5, kind: input, shape index: {}]
  %s6 = inlined_call_operand.vmem [shape: f32[1,256], index: 6, kind: input, shape index: {}]
  %s7 = inlined_call_operand.vmem [shape: f32[128,8], index: 7, kind: input, shape index: {}]
  %s8 = inlined_call_operand.vmem [shape: f32[1,8], index: 8, kind: input, shape index: {}]
  %s9 = inlined_call_operand.hbm [shape: f32[2,8], index: 9, kind: output, shape index: {}]
  %s10 = sld [smem:[#allocation0]]
  $region54: #{bilstm_forward.1} parent=0
    _
  %s12 = ssub.s32 1, %s10
  %s13 = scalar_select 0, %s12, %s10
  $region1: #{bilstm_forward.1} parent=0
    #allocation3 [shape = 'u8[131072]{0}', space=vmem, size = 0x20000, scoped, tag = 'input window, operand 4, single buffered']
    #allocation4 [shape = 's32[1]{0}', space=sflag, size = 0x4, scoped, tag = 'scoped memory for bilstm_forward.1']
    #allocation5 [shape = 's32[1]{0}', space=sflag, size = 0x4, scoped, tag = 'scoped memory for bilstm_forward.1']
    #allocation6 [shape = 'u8[65536]{0}', space=vmem, size = 0x10000, scoped, tag = 'input window, operand 5, single buffered']
    #allocation7 [shape = 's32[1]{0}', space=sflag, size = 0x4, scoped, tag = 'scoped memory for bilstm_forward.1']
    #allocation8 [shape = 'u8[1024]{0}', space=vmem, size = 0x400, scoped, tag = 'output window, operand 0, single buffered']
    %14 = vsyncpa [#allocation4], 0
    %15 = vsyncpa [#allocation7], 0
    %16 = vsyncpa [#allocation5], 0
    // Predicated region
    $region2: #{bilstm_forward.1} parent=1 // pred_check
      _
    $region3: #{bilstm_forward.1} parent=1 // pred_check_branch
      %18 = sbr.rel (0) target = $region5
    $region4: #{bilstm_forward.1} parent=1 // pred_region
      _
    $region5: #{bilstm_forward.1} parent=1 // pred_fallthru
      _
    // Predicated region
    $region6: #{bilstm_forward.1} parent=1 // pred_check
      _
    $region7: #{bilstm_forward.1} parent=1 // pred_check_branch
      %20 = sbr.rel (0) target = $region9
    $region8: #{bilstm_forward.1} parent=1 // pred_region
      _
    $region9: #{bilstm_forward.1} parent=1 // pred_fallthru
      _
    // Predicated region
    $region10: #{bilstm_forward.1} parent=1 // pred_check
      _
    $region11: #{bilstm_forward.1} parent=1 // pred_check_branch
      %22 = sbr.rel (0) target = $region13
    $region12: #{bilstm_forward.1} parent=1 // pred_region
      _
    $region13: #{bilstm_forward.1} parent=1 // pred_fallthru
      _
    // Predicated region
    $region14: #{bilstm_forward.1} parent=1 // pred_check
      _
    $region15: #{bilstm_forward.1} parent=1 // pred_check_branch
      %24 = sbr.rel (0) target = $region17
    $region16: #{bilstm_forward.1} parent=1 // pred_region
      _
    $region17: #{bilstm_forward.1} parent=1 // pred_fallthru
      _
    // Predicated region
    $region18: #{bilstm_forward.1} parent=1 // pred_check
      _
    $region19: #{bilstm_forward.1} parent=1 // pred_check_branch
      %26 = sbr.rel (0) target = $region21
    $region20: #{bilstm_forward.1} parent=1 // pred_region
      %28 = vsyncadd [#allocation4], 0
      %s29 = sshll.u32 %s4, 4
      %s30 = int_to_ptr.hbm [resolvable:$true] %s29
      %s31 = sshll.u32 [#allocation3], 4
      %s32 = int_to_ptr.vmem [resolvable:$true] %s31
      %37 = dma.hbm_to_vmem [thread:$0]  %s30, 4096, %s32, [#allocation4], 256, 256, 16
    $region21: #{bilstm_forward.1} parent=1 // pred_fallthru
      _
    // Predicated region
    $region22: #{bilstm_forward.1} parent=1 // pred_check
      _
    $region23: #{bilstm_forward.1} parent=1 // pred_check_branch
      %39 = sbr.rel (0) target = $region25
    $region24: #{bilstm_forward.1} parent=1 // pred_region
      %41 = vsyncadd [#allocation7], 0
      %s42 = sshll.u32 %s5, 4
      %s43 = int_to_ptr.hbm [resolvable:$true] %s42
      %s44 = sshll.u32 [#allocation6], 4
      %s45 = int_to_ptr.vmem [resolvable:$true] %s44
      %50 = dma.hbm_to_vmem [thread:$0]  %s43, 2048, %s45, [#allocation7], 256, 256, 16
    $region25: #{bilstm_forward.1} parent=1 // pred_fallthru
      _
    // Predicated region
    $region26: #{bilstm_forward.1} parent=1 // pred_check
      _
    $region27: #{bilstm_forward.1} parent=1 // pred_check_branch
      %52 = sbr.rel (0) target = $region29
    $region28: #{bilstm_forward.1} parent=1 // pred_region
      _
    $region29: #{bilstm_forward.1} parent=1 // pred_fallthru
      _
    // Predicated region
    $region30: #{bilstm_forward.1} parent=1 // pred_check
      _
    $region31: #{bilstm_forward.1} parent=1 // pred_check_branch
      %54 = sbr.rel (0) target = $region33
    $region32: #{bilstm_forward.1} parent=1 // pred_region
      _
    $region33: #{bilstm_forward.1} parent=1 // pred_fallthru
      _
    // Predicated region
    $region34: #{bilstm_forward.1} parent=1 // pred_check
      _
    $region35: #{bilstm_forward.1} parent=1 // pred_check_branch
      %56 = sbr.rel (0) target = $region37
    $region36: #{bilstm_forward.1} parent=1 // pred_region
      _
    $region37: #{bilstm_forward.1} parent=1 // pred_fallthru
      _
    // Predicated region
    $region38: #{bilstm_forward.1} parent=1 // pred_check
      _
    $region39: #{bilstm_forward.1} parent=1 // pred_check_branch
      %58 = sbr.rel (0) target = $region41
    $region40: #{bilstm_forward.1} parent=1 // pred_region
      %60 = dma.done [#allocation4], 4096
    $region41: #{bilstm_forward.1} parent=1 // pred_fallthru
      _
    // Predicated region
    $region42: #{bilstm_forward.1} parent=1 // pred_check
      _
    $region43: #{bilstm_forward.1} parent=1 // pred_check_branch
      %62 = sbr.rel (0) target = $region45
    $region44: #{bilstm_forward.1} parent=1 // pred_region
      %64 = dma.done [#allocation7], 2048
    $region45: #{bilstm_forward.1} parent=1 // pred_fallthru
      _
    %v65 = vld [vmem:[%s0] sm:$0xff]
    %v66 = vld [vmem:[%s0 + $0x8] sm:$0xff]
    %v67 = vld [vmem:[%s1] sm:$0xff]
    %v68 = vld [vmem:[%s1 + $0x8] sm:$0xff]
    %v69 = vld [vmem:[%s1 + $0x10] sm:$0xff]
    %v70 = vld [vmem:[%s1 + $0x18] sm:$0xff]
    %v71 = vld [vmem:[%s1 + $0x20] sm:$0xff]
    %v72 = vld [vmem:[%s1 + $0x28] sm:$0xff]
    %v73 = vld [vmem:[%s1 + $0x30] sm:$0xff]
    %v74 = vld [vmem:[%s1 + $0x38] sm:$0xff]
    %v75 = vld [vmem:[%s2] sm:$0xff]
    %v76 = vld [vmem:[%s2 + $0x8] sm:$0xff]
    %v77 = vld [vmem:[%s2 + $0x10] sm:$0xff]
    %v78 = vld [vmem:[%s2 + $0x18] sm:$0xff]
    %v79 = vld [vmem:[%s2 + $0x20] sm:$0xff]
    %v80 = vld [vmem:[%s2 + $0x28] sm:$0xff]
    %v81 = vld [vmem:[%s2 + $0x30] sm:$0xff]
    %v82 = vld [vmem:[%s2 + $0x38] sm:$0xff]
    %v83 = vld [vmem:[%s2 + $0x40] sm:$0xff]
    %v84 = vld [vmem:[%s2 + $0x48] sm:$0xff]
    %v85 = vld [vmem:[%s2 + $0x50] sm:$0xff]
    %v86 = vld [vmem:[%s2 + $0x58] sm:$0xff]
    %v87 = vld [vmem:[%s2 + $0x60] sm:$0xff]
    %v88 = vld [vmem:[%s2 + $0x68] sm:$0xff]
    %v89 = vld [vmem:[%s2 + $0x70] sm:$0xff]
    %v90 = vld [vmem:[%s2 + $0x78] sm:$0xff]
    %v91 = vld [vmem:[%s3] sm:$0x3]
    %v93 = vperm.slane %v91, 0
    %v94 = vperm.slane %v91, 1
    %vm97 = vcmask 261120
    %v99 = vsel %vm97, %v65, 0
    %v102 = vsel %vm97, %v66, 0
    %104 = vmatpush.msra.mxu0 0.0
    %105 = vmatpush.msra.mxu0 0.0
    %106 = vmatpush.msra.mxu0 0.0
    %107 = vmatpush.msra.mxu0 0.0
    %108 = vmatpush.msra.mxu0 0.0
    %109 = vmatpush.msra.mxu0 0.0
    %110 = vmatpush.msra.mxu0 0.0
    %111 = vmatpush.msra.mxu0 0.0
    %112 = vmatpush.msra.mxu0 0.0
    %113 = vmatpush.msra.mxu0 0.0
    %114 = vmatpush.msra.mxu0 0.0
    %115 = vmatpush.msra.mxu0 0.0
    %116 = vmatpush.msra.mxu0 %v73
    %117 = vmatpush.msra.mxu0 %v71
    %118 = vmatpush.msra.mxu0 %v69
    %119 = vmatpush.msra.mxu0 %v67
    %120 = vmatmul.f32.gmra.mxu0 %v99
    %v121 = vpop.f32.mrf.mxu0
    %v122 = vadd.f32 %v93, %v121
    %123 = vmatmul.f32.gmra.mxu0 %v102
    %v124 = vpop.f32.mrf.mxu0
    %v125 = vadd.f32 %v93, %v124
    %126 = vdwg.mxu0
    %127 = vmatpush.msra.mxu0 0.0
    %128 = vmatpush.msra.mxu0 0.0
    %129 = vmatpush.msra.mxu0 0.0
    %130 = vmatpush.msra.mxu0 0.0
    %131 = vmatpush.msra.mxu0 0.0
    %132 = vmatpush.msra.mxu0 0.0
    %133 = vmatpush.msra.mxu0 0.0
    %134 = vmatpush.msra.mxu0 0.0
    %135 = vmatpush.msra.mxu0 0.0
    %136 = vmatpush.msra.mxu0 0.0
    %137 = vmatpush.msra.mxu0 0.0
    %138 = vmatpush.msra.mxu0 0.0
    %139 = vmatpush.msra.mxu0 %v74
    %140 = vmatpush.msra.mxu0 %v72
    %141 = vmatpush.msra.mxu0 %v70
    %142 = vmatpush.msra.mxu0 %v68
    %143 = vmatmul.f32.gmra.mxu0 %v99
    %v144 = vpop.f32.mrf.mxu0
    %v145 = vadd.f32 %v94, %v144
    %146 = vmatmul.f32.gmra.mxu0 %v102
    %v147 = vpop.f32.mrf.mxu0
    %v148 = vadd.f32 %v94, %v147
    %149 = vdwg.mxu0
    %150 = vst [vmem:[#allocation2] sm:$0xff] %v122
    %151 = vst [vmem:[#allocation2 + $0x8] sm:$0xff] %v145
    %152 = vst [vmem:[#allocation2 + $0x10] sm:$0xff] %v125
    %153 = vst [vmem:[#allocation2 + $0x18] sm:$0xff] %v148
    %v154 = vld [vmem:[#allocation2] sm:$0x3]
    %v155 = vld [vmem:[#allocation2 + $0x8] sm:$0x3]
    %vm156 = vcmask 523264
    %v158 = vsel %vm156, 0.0, 0
    %160 = vmatpush.msra.mxu0 0.0
    %161 = vmatpush.msra.mxu0 0.0
    %162 = vmatpush.msra.mxu0 0.0
    %163 = vmatpush.msra.mxu0 0.0
    %164 = vmatpush.msra.mxu0 0.0
    %165 = vmatpush.msra.mxu0 0.0
    %166 = vmatpush.msra.mxu0 0.0
    %167 = vmatpush.msra.mxu0 0.0
    %168 = vmatpush.msra.mxu0 %v89
    %169 = vmatpush.msra.mxu0 %v87
    %170 = vmatpush.msra.mxu0 %v85
    %171 = vmatpush.msra.mxu0 %v83
    %172 = vmatpush.msra.mxu0 %v81
    %173 = vmatpush.msra.mxu0 %v79
    %174 = vmatpush.msra.mxu0 %v77
    %175 = vmatpush.msra.mxu0 %v75
    %176 = vmatmul.f32.gmra.mxu0 %v158
    %v177 = vpop.f32.mrf.mxu0
    %v178 = vadd.f32 0.0, %v177
    %179 = vdwg.mxu0
    %180 = vmatpush.msra.mxu0 0.0
    %181 = vmatpush.msra.mxu0 0.0
    %182 = vmatpush.msra.mxu0 0.0
    %183 = vmatpush.msra.mxu0 0.0
    %184 = vmatpush.msra.mxu0 0.0
    %185 = vmatpush.msra.mxu0 0.0
    %186 = vmatpush.msra.mxu0 0.0
    %187 = vmatpush.msra.mxu0 0.0
    %188 = vmatpush.msra.mxu0 %v90
    %189 = vmatpush.msra.mxu0 %v88
    %190 = vmatpush.msra.mxu0 %v86
    %191 = vmatpush.msra.mxu0 %v84
    %192 = vmatpush.msra.mxu0 %v82
    %193 = vmatpush.msra.mxu0 %v80
    %194 = vmatpush.msra.mxu0 %v78
    %195 = vmatpush.msra.mxu0 %v76
    %196 = vmatmul.f32.gmra.mxu0 %v158
    %v197 = vpop.f32.mrf.mxu0
    %v198 = vadd.f32 0.0, %v197
    %199 = vdwg.mxu0
    %v200 = vadd.f32 %v154, %v178
    %v201 = vadd.f32 %v155, %v198
    %v202 = vxor.u32 %v200, 2147483648
    %v203 = vmul.f32 %v202, 1.442695
    %v204 = vpow.pop %v203
    %v205 = vadd.f32 %v204, 1.0
    %v206 = vrcp.pop %v205
    %v207 = vmul.f32 %v205, %v206
    %v208 = vsub.f32 1.0, %v207
    %v209 = vmul.f32 %v206, %v208
    %v210 = vadd.f32 %v206, %v209
    %vm211 = vweird.f32 %v205
    %vm212 = vweird.f32 %v206
    %vm213 = vmor %vm211, %vm212
    %v214 = vsel %vm213, %v206, %v210
    %v215 = vand.u32 2147483647, %v205
    %vm216 = vcmp.eq.f32.partialorder %v215, 8.507059e+37
    %v217 = vand.u32 %v205, 2147483648
    %v218 = vor.u32 1.1754944e-38, %v217
    %v219 = vsel %vm216, %v218, %v214
    %v220 = vmul.f32 1.0, %v219
    %v221 = vtanh.pop %v201
    %v222 = vxor.u32 %v201, 2147483648
    %v223 = vmul.f32 %v222, 1.442695
    %v224 = vpow.pop %v223
    %v225 = vadd.f32 %v224, 1.0
    %v226 = vrcp.pop %v225
    %v227 = vmul.f32 %v225, %v226
    %v228 = vsub.f32 1.0, %v227
    %v229 = vmul.f32 %v226, %v228
    %v230 = vadd.f32 %v226, %v229
    %vm231 = vweird.f32 %v225
    %vm232 = vweird.f32 %v226
    %vm233 = vmor %vm231, %vm232
    %v234 = vsel %vm233, %v226, %v230
    %v235 = vand.u32 2147483647, %v225
    %vm236 = vcmp.eq.f32.partialorder %v235, 8.507059e+37
    %v237 = vand.u32 %v225, 2147483648
    %v238 = vor.u32 1.1754944e-38, %v237
    %v239 = vsel %vm236, %v238, %v234
    %v240 = vmul.f32 1.0, %v239
    %v241 = vmul.f32 %v220, 0.0
    %v242 = vmul.f32 %v220, %v221
    %244 = vrot.lane.b32.xlu0 %v242, 64
    %v245 = vpop.permute.xlu0 %244
    %v247 = vadd.f32 %v241, %v245
    %v248 = vtanh.pop %v247
    %v249 = vmul.f32 %v240, %v248
    %v250 = vld [vmem:[#allocation2] sm:$0xc]
    %v251 = vld [vmem:[#allocation2 + $0x8] sm:$0xc]
    %253 = vrot.lane.b32.xlu0 %v249, 64
    %v254 = vpop.permute.xlu0 %253
    %v255 = vsel %vm156, %v254, 0
    %257 = vmatpush.msra.mxu0 0.0
    %258 = vmatpush.msra.mxu0 0.0
    %259 = vmatpush.msra.mxu0 0.0
    %260 = vmatpush.msra.mxu0 0.0
    %261 = vmatpush.msra.mxu0 0.0
    %262 = vmatpush.msra.mxu0 0.0
    %263 = vmatpush.msra.mxu0 0.0
    %264 = vmatpush.msra.mxu0 0.0
    %265 = vmatpush.msra.mxu0 %v89
    %266 = vmatpush.msra.mxu0 %v87
    %267 = vmatpush.msra.mxu0 %v85
    %268 = vmatpush.msra.mxu0 %v83
    %269 = vmatpush.msra.mxu0 %v81
    %270 = vmatpush.msra.mxu0 %v79
    %271 = vmatpush.msra.mxu0 %v77
    %272 = vmatpush.msra.mxu0 %v75
    %273 = vmatmul.f32.gmra.mxu0 %v255
    %v274 = vpop.f32.mrf.mxu0
    %v275 = vadd.f32 0.0, %v274
    %276 = vdwg.mxu0
    %277 = vmatpush.msra.mxu0 0.0
    %278 = vmatpush.msra.mxu0 0.0
    %279 = vmatpush.msra.mxu0 0.0
    %280 = vmatpush.msra.mxu0 0.0
    %281 = vmatpush.msra.mxu0 0.0
    %282 = vmatpush.msra.mxu0 0.0
    %283 = vmatpush.msra.mxu0 0.0
    %284 = vmatpush.msra.mxu0 0.0
    %285 = vmatpush.msra.mxu0 %v90
    %286 = vmatpush.msra.mxu0 %v88
    %287 = vmatpush.msra.mxu0 %v86
    %288 = vmatpush.msra.mxu0 %v84
    %289 = vmatpush.msra.mxu0 %v82
    %290 = vmatpush.msra.mxu0 %v80
    %291 = vmatpush.msra.mxu0 %v78
    %292 = vmatpush.msra.mxu0 %v76
    %293 = vmatmul.f32.gmra.mxu0 %v255
    %v294 = vpop.f32.mrf.mxu0
    %v295 = vadd.f32 0.0, %v294
    %296 = vdwg.mxu0
    %v299 = vrot.slane %v275, 6
    %v300 = vrot.slane %v295, 6
    %v303 = vadd.f32 %v250, %v299
    %v304 = vadd.f32 %v251, %v300
    %v305 = vxor.u32 %v303, 2147483648
    %v306 = vmul.f32 %v305, 1.442695
    %v307 = vpow.pop %v306
    %v308 = vadd.f32 %v307, 1.0
    %v309 = vrcp.pop %v308
    %v310 = vmul.f32 %v308, %v309
    %v311 = vsub.f32 1.0, %v310
    %v312 = vmul.f32 %v309, %v311
    %v313 = vadd.f32 %v309, %v312
    %vm314 = vweird.f32 %v308
    %vm315 = vweird.f32 %v309
    %vm316 = vmor %vm314, %vm315
    %v317 = vsel %vm316, %v309, %v313
    %v318 = vand.u32 2147483647, %v308
    %vm319 = vcmp.eq.f32.partialorder %v318, 8.507059e+37
    %v320 = vand.u32 %v308, 2147483648
    %v321 = vor.u32 1.1754944e-38, %v320
    %v322 = vsel %vm319, %v321, %v317
    %v323 = vmul.f32 1.0, %v322
    %v324 = vtanh.pop %v304
    %v325 = vxor.u32 %v304, 2147483648
    %v326 = vmul.f32 %v325, 1.442695
    %v327 = vpow.pop %v326
    %v328 = vadd.f32 %v327, 1.0
    %v329 = vrcp.pop %v328
    %v330 = vmul.f32 %v328, %v329
    %v331 = vsub.f32 1.0, %v330
    %v332 = vmul.f32 %v329, %v331
    %v333 = vadd.f32 %v329, %v332
    %vm334 = vweird.f32 %v328
    %vm335 = vweird.f32 %v329
    %vm336 = vmor %vm334, %vm335
    %v337 = vsel %vm336, %v329, %v333
    %v338 = vand.u32 2147483647, %v328
    %vm339 = vcmp.eq.f32.partialorder %v338, 8.507059e+37
    %v340 = vand.u32 %v328, 2147483648
    %v341 = vor.u32 1.1754944e-38, %v340
    %v342 = vsel %vm339, %v341, %v337
    %v343 = vmul.f32 1.0, %v342
    %v345 = vrot.slane %v247, 6
    %v347 = vmul.f32 %v323, %v345
    %v348 = vmul.f32 %v323, %v324
    %350 = vrot.lane.b32.xlu0 %v348, 64
    %v351 = vpop.permute.xlu0 %350
    %v353 = vadd.f32 %v347, %v351
    %v354 = vtanh.pop %v353
    %v355 = vmul.f32 %v343, %v354
    %v356 = vld [vmem:[#allocation2] sm:$0x30]
    %v357 = vld [vmem:[#allocation2 + $0x8] sm:$0x30]
    %v359 = vrot.slane %v355, 2
    %360 = vrot.lane.b32.xlu0 %v359, 64
    %v361 = vpop.permute.xlu0 %360
    %v362 = vsel %vm156, %v361, 0
    %364 = vmatpush.msra.mxu0 0.0
    %365 = vmatpush.msra.mxu0 0.0
    %366 = vmatpush.msra.mxu0 0.0
    %367 = vmatpush.msra.mxu0 0.0
    %368 = vmatpush.msra.mxu0 0.0
    %369 = vmatpush.msra.mxu0 0.0
    %370 = vmatpush.msra.mxu0 0.0
    %371 = vmatpush.msra.mxu0 0.0
    %372 = vmatpush.msra.mxu0 %v89
    %373 = vmatpush.msra.mxu0 %v87
    %374 = vmatpush.msra.mxu0 %v85
    %375 = vmatpush.msra.mxu0 %v83
    %376 = vmatpush.msra.mxu0 %v81
    %377 = vmatpush.msra.mxu0 %v79
    %378 = vmatpush.msra.mxu0 %v77
    %379 = vmatpush.msra.mxu0 %v75
    %380 = vmatmul.f32.gmra.mxu0 %v362
    %v381 = vpop.f32.mrf.mxu0
    %v382 = vadd.f32 0.0, %v381
    %383 = vdwg.mxu0
    %384 = vmatpush.msra.mxu0 0.0
    %385 = vmatpush.msra.mxu0 0.0
    %386 = vmatpush.msra.mxu0 0.0
    %387 = vmatpush.msra.mxu0 0.0
    %388 = vmatpush.msra.mxu0 0.0
    %389 = vmatpush.msra.mxu0 0.0
    %390 = vmatpush.msra.mxu0 0.0
    %391 = vmatpush.msra.mxu0 0.0
    %392 = vmatpush.msra.mxu0 %v90
    %393 = vmatpush.msra.mxu0 %v88
    %394 = vmatpush.msra.mxu0 %v86
    %395 = vmatpush.msra.mxu0 %v84
    %396 = vmatpush.msra.mxu0 %v82
    %397 = vmatpush.msra.mxu0 %v80
    %398 = vmatpush.msra.mxu0 %v78
    %399 = vmatpush.msra.mxu0 %v76
    %400 = vmatmul.f32.gmra.mxu0 %v362
    %v401 = vpop.f32.mrf.mxu0
    %v402 = vadd.f32 0.0, %v401
    %403 = vdwg.mxu0
    %v406 = vrot.slane %v382, 4
    %v407 = vrot.slane %v402, 4
    %v410 = vadd.f32 %v356, %v406
    %v411 = vadd.f32 %v357, %v407
    %v412 = vxor.u32 %v410, 2147483648
    %v413 = vmul.f32 %v412, 1.442695
    %v414 = vpow.pop %v413
    %v415 = vadd.f32 %v414, 1.0
    %v416 = vrcp.pop %v415
    %v417 = vmul.f32 %v415, %v416
    %v418 = vsub.f32 1.0, %v417
    %v419 = vmul.f32 %v416, %v418
    %v420 = vadd.f32 %v416, %v419
    %vm421 = vweird.f32 %v415
    %vm422 = vweird.f32 %v416
    %vm423 = vmor %vm421, %vm422
    %v424 = vsel %vm423, %v416, %v420
    %v425 = vand.u32 2147483647, %v415
    %vm426 = vcmp.eq.f32.partialorder %v425, 8.507059e+37
    %v427 = vand.u32 %v415, 2147483648
    %v428 = vor.u32 1.1754944e-38, %v427
    %v429 = vsel %vm426, %v428, %v424
    %v430 = vmul.f32 1.0, %v429
    %v431 = vtanh.pop %v411
    %v432 = vxor.u32 %v411, 2147483648
    %v433 = vmul.f32 %v432, 1.442695
    %v434 = vpow.pop %v433
    %v435 = vadd.f32 %v434, 1.0
    %v436 = vrcp.pop %v435
    %v437 = vmul.f32 %v435, %v436
    %v438 = vsub.f32 1.0, %v437
    %v439 = vmul.f32 %v436, %v438
    %v440 = vadd.f32 %v436, %v439
    %vm441 = vweird.f32 %v435
    %vm442 = vweird.f32 %v436
    %vm443 = vmor %vm441, %vm442
    %v444 = vsel %vm443, %v436, %v440
    %v445 = vand.u32 2147483647, %v435
    %vm446 = vcmp.eq.f32.partialorder %v445, 8.507059e+37
    %v447 = vand.u32 %v435, 2147483648
    %v448 = vor.u32 1.1754944e-38, %v447
    %v449 = vsel %vm446, %v448, %v444
    %v450 = vmul.f32 1.0, %v449
    %v452 = vrot.slane %v353, 6
    %v454 = vmul.f32 %v430, %v452
    %v455 = vmul.f32 %v430, %v431
    %457 = vrot.lane.b32.xlu0 %v455, 64
    %v458 = vpop.permute.xlu0 %457
    %v460 = vadd.f32 %v454, %v458
    %v461 = vtanh.pop %v460
    %v462 = vmul.f32 %v450, %v461
    %v463 = vld [vmem:[#allocation2] sm:$0xc0]
    %v464 = vld [vmem:[#allocation2 + $0x8] sm:$0xc0]
    %v466 = vrot.slane %v462, 4
    %467 = vrot.lane.b32.xlu0 %v466, 64
    %v468 = vpop.permute.xlu0 %467
    %v469 = vsel %vm156, %v468, 0
    %471 = vmatpush.msra.mxu0 0.0
    %472 = vmatpush.msra.mxu0 0.0
    %473 = vmatpush.msra.mxu0 0.0
    %474 = vmatpush.msra.mxu0 0.0
    %475 = vmatpush.msra.mxu0 0.0
    %476 = vmatpush.msra.mxu0 0.0
    %477 = vmatpush.msra.mxu0 0.0
    %478 = vmatpush.msra.mxu0 0.0
    %479 = vmatpush.msra.mxu0 %v89
    %480 = vmatpush.msra.mxu0 %v87
    %481 = vmatpush.msra.mxu0 %v85
    %482 = vmatpush.msra.mxu0 %v83
    %483 = vmatpush.msra.mxu0 %v81
    %484 = vmatpush.msra.mxu0 %v79
    %485 = vmatpush.msra.mxu0 %v77
    %486 = vmatpush.msra.mxu0 %v75
    %487 = vmatmul.f32.gmra.mxu0 %v469
    %v488 = vpop.f32.mrf.mxu0
    %v489 = vadd.f32 0.0, %v488
    %490 = vdwg.mxu0
    %491 = vmatpush.msra.mxu0 0.0
    %492 = vmatpush.msra.mxu0 0.0
    %493 = vmatpush.msra.mxu0 0.0
    %494 = vmatpush.msra.mxu0 0.0
    %495 = vmatpush.msra.mxu0 0.0
    %496 = vmatpush.msra.mxu0 0.0
    %497 = vmatpush.msra.mxu0 0.0
    %498 = vmatpush.msra.mxu0 0.0
    %499 = vmatpush.msra.mxu0 %v90
    %500 = vmatpush.msra.mxu0 %v88
    %501 = vmatpush.msra.mxu0 %v86
    %502 = vmatpush.msra.mxu0 %v84
    %503 = vmatpush.msra.mxu0 %v82
    %504 = vmatpush.msra.mxu0 %v80
    %505 = vmatpush.msra.mxu0 %v78
    %506 = vmatpush.msra.mxu0 %v76
    %507 = vmatmul.f32.gmra.mxu0 %v469
    %v508 = vpop.f32.mrf.mxu0
    %v509 = vadd.f32 0.0, %v508
    %510 = vdwg.mxu0
    %v513 = vrot.slane %v489, 2
    %v514 = vrot.slane %v509, 2
    %v517 = vadd.f32 %v463, %v513
    %v518 = vadd.f32 %v464, %v514
    %v519 = vxor.u32 %v517, 2147483648
    %v520 = vmul.f32 %v519, 1.442695
    %v521 = vpow.pop %v520
    %v522 = vadd.f32 %v521, 1.0
    %v523 = vrcp.pop %v522
    %v524 = vmul.f32 %v522, %v523
    %v525 = vsub.f32 1.0, %v524
    %v526 = vmul.f32 %v523, %v525
    %v527 = vadd.f32 %v523, %v526
    %vm528 = vweird.f32 %v522
    %vm529 = vweird.f32 %v523
    %vm530 = vmor %vm528, %vm529
    %v531 = vsel %vm530, %v523, %v527
    %v532 = vand.u32 2147483647, %v522
    %vm533 = vcmp.eq.f32.partialorder %v532, 8.507059e+37
    %v534 = vand.u32 %v522, 2147483648
    %v535 = vor.u32 1.1754944e-38, %v534
    %v536 = vsel %vm533, %v535, %v531
    %v537 = vmul.f32 1.0, %v536
    %v538 = vtanh.pop %v518
    %v539 = vxor.u32 %v518, 2147483648
    %v540 = vmul.f32 %v539, 1.442695
    %v541 = vpow.pop %v540
    %v542 = vadd.f32 %v541, 1.0
    %v543 = vrcp.pop %v542
    %v544 = vmul.f32 %v542, %v543
    %v545 = vsub.f32 1.0, %v544
    %v546 = vmul.f32 %v543, %v545
    %v547 = vadd.f32 %v543, %v546
    %vm548 = vweird.f32 %v542
    %vm549 = vweird.f32 %v543
    %vm550 = vmor %vm548, %vm549
    %v551 = vsel %vm550, %v543, %v547
    %v552 = vand.u32 2147483647, %v542
    %vm553 = vcmp.eq.f32.partialorder %v552, 8.507059e+37
    %v554 = vand.u32 %v542, 2147483648
    %v555 = vor.u32 1.1754944e-38, %v554
    %v556 = vsel %vm553, %v555, %v551
    %v557 = vmul.f32 1.0, %v556
    %v559 = vrot.slane %v460, 6
    %v561 = vmul.f32 %v537, %v559
    %v562 = vmul.f32 %v537, %v538
    %564 = vrot.lane.b32.xlu0 %v562, 64
    %v565 = vpop.permute.xlu0 %564
    %v567 = vadd.f32 %v561, %v565
    %v568 = vtanh.pop %v567
    %v569 = vmul.f32 %v557, %v568
    %v570 = vld [vmem:[#allocation2 + $0x10] sm:$0x3]
    %v571 = vld [vmem:[#allocation2 + $0x18] sm:$0x3]
    %v573 = vrot.slane %v569, 6
    %574 = vrot.lane.b32.xlu0 %v573, 64
    %v575 = vpop.permute.xlu0 %574
    %v576 = vsel %vm156, %v575, 0
    %578 = vmatpush.msra.mxu0 0.0
    %579 = vmatpush.msra.mxu0 0.0
    %580 = vmatpush.msra.mxu0 0.0
    %581 = vmatpush.msra.mxu0 0.0
    %582 = vmatpush.msra.mxu0 0.0
    %583 = vmatpush.msra.mxu0 0.0
    %584 = vmatpush.msra.mxu0 0.0
    %585 = vmatpush.msra.mxu0 0.0
    %586 = vmatpush.msra.mxu0 %v89
    %587 = vmatpush.msra.mxu0 %v87
    %588 = vmatpush.msra.mxu0 %v85
    %589 = vmatpush.msra.mxu0 %v83
    %590 = vmatpush.msra.mxu0 %v81
    %591 = vmatpush.msra.mxu0 %v79
    %592 = vmatpush.msra.mxu0 %v77
    %593 = vmatpush.msra.mxu0 %v75
    %594 = vmatmul.f32.gmra.mxu0 %v576
    %v595 = vpop.f32.mrf.mxu0
    %v596 = vadd.f32 0.0, %v595
    %597 = vdwg.mxu0
    %598 = vmatpush.msra.mxu0 0.0
    %599 = vmatpush.msra.mxu0 0.0
    %600 = vmatpush.msra.mxu0 0.0
    %601 = vmatpush.msra.mxu0 0.0
    %602 = vmatpush.msra.mxu0 0.0
    %603 = vmatpush.msra.mxu0 0.0
    %604 = vmatpush.msra.mxu0 0.0
    %605 = vmatpush.msra.mxu0 0.0
    %606 = vmatpush.msra.mxu0 %v90
    %607 = vmatpush.msra.mxu0 %v88
    %608 = vmatpush.msra.mxu0 %v86
    %609 = vmatpush.msra.mxu0 %v84
    %610 = vmatpush.msra.mxu0 %v82
    %611 = vmatpush.msra.mxu0 %v80
    %612 = vmatpush.msra.mxu0 %v78
    %613 = vmatpush.msra.mxu0 %v76
    %614 = vmatmul.f32.gmra.mxu0 %v576
    %v615 = vpop.f32.mrf.mxu0
    %v616 = vadd.f32 0.0, %v615
    %617 = vdwg.mxu0
    %v618 = vadd.f32 %v570, %v596
    %v619 = vadd.f32 %v571, %v616
    %v620 = vxor.u32 %v618, 2147483648
    %v621 = vmul.f32 %v620, 1.442695
    %v622 = vpow.pop %v621
    %v623 = vadd.f32 %v622, 1.0
    %v624 = vrcp.pop %v623
    %v625 = vmul.f32 %v623, %v624
    %v626 = vsub.f32 1.0, %v625
    %v627 = vmul.f32 %v624, %v626
    %v628 = vadd.f32 %v624, %v627
    %vm629 = vweird.f32 %v623
    %vm630 = vweird.f32 %v624
    %vm631 = vmor %vm629, %vm630
    %v632 = vsel %vm631, %v624, %v628
    %v633 = vand.u32 2147483647, %v623
    %vm634 = vcmp.eq.f32.partialorder %v633, 8.507059e+37
    %v635 = vand.u32 %v623, 2147483648
    %v636 = vor.u32 1.1754944e-38, %v635
    %v637 = vsel %vm634, %v636, %v632
    %v638 = vmul.f32 1.0, %v637
    %v639 = vtanh.pop %v619
    %v640 = vxor.u32 %v619, 2147483648
    %v641 = vmul.f32 %v640, 1.442695
    %v642 = vpow.pop %v641
    %v643 = vadd.f32 %v642, 1.0
    %v644 = vrcp.pop %v643
    %v645 = vmul.f32 %v643, %v644
    %v646 = vsub.f32 1.0, %v645
    %v647 = vmul.f32 %v644, %v646
    %v648 = vadd.f32 %v644, %v647
    %vm649 = vweird.f32 %v643
    %vm650 = vweird.f32 %v644
    %vm651 = vmor %vm649, %vm650
    %v652 = vsel %vm651, %v644, %v648
    %v653 = vand.u32 2147483647, %v643
    %vm654 = vcmp.eq.f32.partialorder %v653, 8.507059e+37
    %v655 = vand.u32 %v643, 2147483648
    %v656 = vor.u32 1.1754944e-38, %v655
    %v657 = vsel %vm654, %v656, %v652
    %v658 = vmul.f32 1.0, %v657
    %v660 = vrot.slane %v567, 6
    %v662 = vmul.f32 %v638, %v660
    %v663 = vmul.f32 %v638, %v639
    %665 = vrot.lane.b32.xlu0 %v663, 64
    %v666 = vpop.permute.xlu0 %665
    %v668 = vadd.f32 %v662, %v666
    %v669 = vtanh.pop %v668
    %v670 = vmul.f32 %v658, %v669
    %v671 = vld [vmem:[#allocation2 + $0x10] sm:$0xc]
    %v672 = vld [vmem:[#allocation2 + $0x18] sm:$0xc]
    %674 = vrot.lane.b32.xlu0 %v670, 64
    %v675 = vpop.permute.xlu0 %674
    %v676 = vsel %vm156, %v675, 0
    %678 = vmatpush.msra.mxu0 0.0
    %679 = vmatpush.msra.mxu0 0.0
    %680 = vmatpush.msra.mxu0 0.0
    %681 = vmatpush.msra.mxu0 0.0
    %682 = vmatpush.msra.mxu0 0.0
    %683 = vmatpush.msra.mxu0 0.0
    %684 = vmatpush.msra.mxu0 0.0
    %685 = vmatpush.msra.mxu0 0.0
    %686 = vmatpush.msra.mxu0 %v89
    %687 = vmatpush.msra.mxu0 %v87
    %688 = vmatpush.msra.mxu0 %v85
    %689 = vmatpush.msra.mxu0 %v83
    %690 = vmatpush.msra.mxu0 %v81
    %691 = vmatpush.msra.mxu0 %v79
    %692 = vmatpush.msra.mxu0 %v77
    %693 = vmatpush.msra.mxu0 %v75
    %694 = vmatmul.f32.gmra.mxu0 %v676
    %v695 = vpop.f32.mrf.mxu0
    %v696 = vadd.f32 0.0, %v695
    %697 = vdwg.mxu0
    %698 = vmatpush.msra.mxu0 0.0
    %699 = vmatpush.msra.mxu0 0.0
    %700 = vmatpush.msra.mxu0 0.0
    %701 = vmatpush.msra.mxu0 0.0
    %702 = vmatpush.msra.mxu0 0.0
    %703 = vmatpush.msra.mxu0 0.0
    %704 = vmatpush.msra.mxu0 0.0
    %705 = vmatpush.msra.mxu0 0.0
    %706 = vmatpush.msra.mxu0 %v90
    %707 = vmatpush.msra.mxu0 %v88
    %708 = vmatpush.msra.mxu0 %v86
    %709 = vmatpush.msra.mxu0 %v84
    %710 = vmatpush.msra.mxu0 %v82
    %711 = vmatpush.msra.mxu0 %v80
    %712 = vmatpush.msra.mxu0 %v78
    %713 = vmatpush.msra.mxu0 %v76
    %714 = vmatmul.f32.gmra.mxu0 %v676
    %v715 = vpop.f32.mrf.mxu0
    %v716 = vadd.f32 0.0, %v715
    %717 = vdwg.mxu0
    %v720 = vrot.slane %v696, 6
    %v721 = vrot.slane %v716, 6
    %v724 = vadd.f32 %v671, %v720
    %v725 = vadd.f32 %v672, %v721
    %v726 = vxor.u32 %v724, 2147483648
    %v727 = vmul.f32 %v726, 1.442695
    %v728 = vpow.pop %v727
    %v729 = vadd.f32 %v728, 1.0
    %v730 = vrcp.pop %v729
    %v731 = vmul.f32 %v729, %v730
    %v732 = vsub.f32 1.0, %v731
    %v733 = vmul.f32 %v730, %v732
    %v734 = vadd.f32 %v730, %v733
    %vm735 = vweird.f32 %v729
    %vm736 = vweird.f32 %v730
    %vm737 = vmor %vm735, %vm736
    %v738 = vsel %vm737, %v730, %v734
    %v739 = vand.u32 2147483647, %v729
    %vm740 = vcmp.eq.f32.partialorder %v739, 8.507059e+37
    %v741 = vand.u32 %v729, 2147483648
    %v742 = vor.u32 1.1754944e-38, %v741
    %v743 = vsel %vm740, %v742, %v738
    %v744 = vmul.f32 1.0, %v743
    %v745 = vtanh.pop %v725
    %v746 = vxor.u32 %v725, 2147483648
    %v747 = vmul.f32 %v746, 1.442695
    %v748 = vpow.pop %v747
    %v749 = vadd.f32 %v748, 1.0
    %v750 = vrcp.pop %v749
    %v751 = vmul.f32 %v749, %v750
    %v752 = vsub.f32 1.0, %v751
    %v753 = vmul.f32 %v750, %v752
    %v754 = vadd.f32 %v750, %v753
    %vm755 = vweird.f32 %v749
    %vm756 = vweird.f32 %v750
    %vm757 = vmor %vm755, %vm756
    %v758 = vsel %vm757, %v750, %v754
    %v759 = vand.u32 2147483647, %v749
    %vm760 = vcmp.eq.f32.partialorder %v759, 8.507059e+37
    %v761 = vand.u32 %v749, 2147483648
    %v762 = vor.u32 1.1754944e-38, %v761
    %v763 = vsel %vm760, %v762, %v758
    %v764 = vmul.f32 1.0, %v763
    %v766 = vrot.slane %v668, 6
    %v768 = vmul.f32 %v744, %v766
    %v769 = vmul.f32 %v744, %v745
    %771 = vrot.lane.b32.xlu0 %v769, 64
    %v772 = vpop.permute.xlu0 %771
    %v774 = vadd.f32 %v768, %v772
    %v775 = vtanh.pop %v774
    %v776 = vmul.f32 %v764, %v775
    %v777 = vld [vmem:[#allocation2 + $0x10] sm:$0x30]
    %v778 = vld [vmem:[#allocation2 + $0x18] sm:$0x30]
    %v780 = vrot.slane %v776, 2
    %781 = vrot.lane.b32.xlu0 %v780, 64
    %v782 = vpop.permute.xlu0 %781
    %v783 = vsel %vm156, %v782, 0
    %785 = vmatpush.msra.mxu0 0.0
    %786 = vmatpush.msra.mxu0 0.0
    %787 = vmatpush.msra.mxu0 0.0
    %788 = vmatpush.msra.mxu0 0.0
    %789 = vmatpush.msra.mxu0 0.0
    %790 = vmatpush.msra.mxu0 0.0
    %791 = vmatpush.msra.mxu0 0.0
    %792 = vmatpush.msra.mxu0 0.0
    %793 = vmatpush.msra.mxu0 %v89
    %794 = vmatpush.msra.mxu0 %v87
    %795 = vmatpush.msra.mxu0 %v85
    %796 = vmatpush.msra.mxu0 %v83
    %797 = vmatpush.msra.mxu0 %v81
    %798 = vmatpush.msra.mxu0 %v79
    %799 = vmatpush.msra.mxu0 %v77
    %800 = vmatpush.msra.mxu0 %v75
    %801 = vmatmul.f32.gmra.mxu0 %v783
    %v802 = vpop.f32.mrf.mxu0
    %v803 = vadd.f32 0.0, %v802
    %804 = vdwg.mxu0
    %805 = vmatpush.msra.mxu0 0.0
    %806 = vmatpush.msra.mxu0 0.0
    %807 = vmatpush.msra.mxu0 0.0
    %808 = vmatpush.msra.mxu0 0.0
    %809 = vmatpush.msra.mxu0 0.0
    %810 = vmatpush.msra.mxu0 0.0
    %811 = vmatpush.msra.mxu0 0.0
    %812 = vmatpush.msra.mxu0 0.0
    %813 = vmatpush.msra.mxu0 %v90
    %814 = vmatpush.msra.mxu0 %v88
    %815 = vmatpush.msra.mxu0 %v86
    %816 = vmatpush.msra.mxu0 %v84
    %817 = vmatpush.msra.mxu0 %v82
    %818 = vmatpush.msra.mxu0 %v80
    %819 = vmatpush.msra.mxu0 %v78
    %820 = vmatpush.msra.mxu0 %v76
    %821 = vmatmul.f32.gmra.mxu0 %v783
    %v822 = vpop.f32.mrf.mxu0
    %v823 = vadd.f32 0.0, %v822
    %824 = vdwg.mxu0
    %v827 = vrot.slane %v803, 4
    %v828 = vrot.slane %v823, 4
    %v831 = vadd.f32 %v777, %v827
    %v832 = vadd.f32 %v778, %v828
    %v833 = vxor.u32 %v831, 2147483648
    %v834 = vmul.f32 %v833, 1.442695
    %v835 = vpow.pop %v834
    %v836 = vadd.f32 %v835, 1.0
    %v837 = vrcp.pop %v836
    %v838 = vmul.f32 %v836, %v837
    %v839 = vsub.f32 1.0, %v838
    %v840 = vmul.f32 %v837, %v839
    %v841 = vadd.f32 %v837, %v840
    %vm842 = vweird.f32 %v836
    %vm843 = vweird.f32 %v837
    %vm844 = vmor %vm842, %vm843
    %v845 = vsel %vm844, %v837, %v841
    %v846 = vand.u32 2147483647, %v836
    %vm847 = vcmp.eq.f32.partialorder %v846, 8.507059e+37
    %v848 = vand.u32 %v836, 2147483648
    %v849 = vor.u32 1.1754944e-38, %v848
    %v850 = vsel %vm847, %v849, %v845
    %v851 = vmul.f32 1.0, %v850
    %v852 = vtanh.pop %v832
    %v853 = vxor.u32 %v832, 2147483648
    %v854 = vmul.f32 %v853, 1.442695
    %v855 = vpow.pop %v854
    %v856 = vadd.f32 %v855, 1.0
    %v857 = vrcp.pop %v856
    %v858 = vmul.f32 %v856, %v857
    %v859 = vsub.f32 1.0, %v858
    %v860 = vmul.f32 %v857, %v859
    %v861 = vadd.f32 %v857, %v860
    %vm862 = vweird.f32 %v856
    %vm863 = vweird.f32 %v857
    %vm864 = vmor %vm862, %vm863
    %v865 = vsel %vm864, %v857, %v861
    %v866 = vand.u32 2147483647, %v856
    %vm867 = vcmp.eq.f32.partialorder %v866, 8.507059e+37
    %v868 = vand.u32 %v856, 2147483648
    %v869 = vor.u32 1.1754944e-38, %v868
    %v870 = vsel %vm867, %v869, %v865
    %v871 = vmul.f32 1.0, %v870
    %v873 = vrot.slane %v774, 6
    %v875 = vmul.f32 %v851, %v873
    %v876 = vmul.f32 %v851, %v852
    %878 = vrot.lane.b32.xlu0 %v876, 64
    %v879 = vpop.permute.xlu0 %878
    %v881 = vadd.f32 %v875, %v879
    %v882 = vtanh.pop %v881
    %v883 = vmul.f32 %v871, %v882
    %v884 = vld [vmem:[#allocation2 + $0x10] sm:$0xc0]
    %v885 = vld [vmem:[#allocation2 + $0x18] sm:$0xc0]
    %v887 = vrot.slane %v883, 4
    %888 = vrot.lane.b32.xlu0 %v887, 64
    %v889 = vpop.permute.xlu0 %888
    %v890 = vsel %vm156, %v889, 0
    %892 = vmatpush.msra.mxu0 0.0
    %893 = vmatpush.msra.mxu0 0.0
    %894 = vmatpush.msra.mxu0 0.0
    %895 = vmatpush.msra.mxu0 0.0
    %896 = vmatpush.msra.mxu0 0.0
    %897 = vmatpush.msra.mxu0 0.0
    %898 = vmatpush.msra.mxu0 0.0
    %899 = vmatpush.msra.mxu0 0.0
    %900 = vmatpush.msra.mxu0 %v89
    %901 = vmatpush.msra.mxu0 %v87
    %902 = vmatpush.msra.mxu0 %v85
    %903 = vmatpush.msra.mxu0 %v83
    %904 = vmatpush.msra.mxu0 %v81
    %905 = vmatpush.msra.mxu0 %v79
    %906 = vmatpush.msra.mxu0 %v77
    %907 = vmatpush.msra.mxu0 %v75
    %908 = vmatmul.f32.gmra.mxu0 %v890
    %v909 = vpop.f32.mrf.mxu0
    %v910 = vadd.f32 0.0, %v909
    %911 = vdwg.mxu0
    %912 = vmatpush.msra.mxu0 0.0
    %913 = vmatpush.msra.mxu0 0.0
    %914 = vmatpush.msra.mxu0 0.0
    %915 = vmatpush.msra.mxu0 0.0
    %916 = vmatpush.msra.mxu0 0.0
    %917 = vmatpush.msra.mxu0 0.0
    %918 = vmatpush.msra.mxu0 0.0
    %919 = vmatpush.msra.mxu0 0.0
    %920 = vmatpush.msra.mxu0 %v90
    %921 = vmatpush.msra.mxu0 %v88
    %922 = vmatpush.msra.mxu0 %v86
    %923 = vmatpush.msra.mxu0 %v84
    %924 = vmatpush.msra.mxu0 %v82
    %925 = vmatpush.msra.mxu0 %v80
    %926 = vmatpush.msra.mxu0 %v78
    %927 = vmatpush.msra.mxu0 %v76
    %928 = vmatmul.f32.gmra.mxu0 %v890
    %v929 = vpop.f32.mrf.mxu0
    %v930 = vadd.f32 0.0, %v929
    %931 = vdwg.mxu0
    %v934 = vrot.slane %v910, 2
    %v935 = vrot.slane %v930, 2
    %v938 = vadd.f32 %v884, %v934
    %v939 = vadd.f32 %v885, %v935
    %v940 = vxor.u32 %v938, 2147483648
    %v941 = vmul.f32 %v940, 1.442695
    %v942 = vpow.pop %v941
    %v943 = vadd.f32 %v942, 1.0
    %v944 = vrcp.pop %v943
    %v945 = vmul.f32 %v943, %v944
    %v946 = vsub.f32 1.0, %v945
    %v947 = vmul.f32 %v944, %v946
    %v948 = vadd.f32 %v944, %v947
    %vm949 = vweird.f32 %v943
    %vm950 = vweird.f32 %v944
    %vm951 = vmor %vm949, %vm950
    %v952 = vsel %vm951, %v944, %v948
    %v953 = vand.u32 2147483647, %v943
    %vm954 = vcmp.eq.f32.partialorder %v953, 8.507059e+37
    %v955 = vand.u32 %v943, 2147483648
    %v956 = vor.u32 1.1754944e-38, %v955
    %v957 = vsel %vm954, %v956, %v952
    %v958 = vmul.f32 1.0, %v957
    %v959 = vtanh.pop %v939
    %v960 = vxor.u32 %v939, 2147483648
    %v961 = vmul.f32 %v960, 1.442695
    %v962 = vpow.pop %v961
    %v963 = vadd.f32 %v962, 1.0
    %v964 = vrcp.pop %v963
    %v965 = vmul.f32 %v963, %v964
    %v966 = vsub.f32 1.0, %v965
    %v967 = vmul.f32 %v964, %v966
    %v968 = vadd.f32 %v964, %v967
    %vm969 = vweird.f32 %v963
    %vm970 = vweird.f32 %v964
    %vm971 = vmor %vm969, %vm970
    %v972 = vsel %vm971, %v964, %v968
    %v973 = vand.u32 2147483647, %v963
    %vm974 = vcmp.eq.f32.partialorder %v973, 8.507059e+37
    %v975 = vand.u32 %v963, 2147483648
    %v976 = vor.u32 1.1754944e-38, %v975
    %v977 = vsel %vm974, %v976, %v972
    %v978 = vmul.f32 1.0, %v977
    %v980 = vrot.slane %v881, 6
    %v982 = vmul.f32 %v958, %v980
    %v983 = vmul.f32 %v958, %v959
    %985 = vrot.lane.b32.xlu0 %v983, 64
    %v986 = vpop.permute.xlu0 %985
    %v988 = vadd.f32 %v982, %v986
    %v989 = vtanh.pop %v988
    %v990 = vmul.f32 %v978, %v989
    %v993 = vrot.slane %v990, 6
    %v995 = vsel %vm156, %v254, %v993
    %996 = vrot.lane.b32.xlu0 %v355, 64
    %v997 = vpop.permute.xlu0 %996
    %v999 = vrot.slane %v883, 2
    %v1001 = vsel %vm156, %v997, %v999
    %1002 = vrot.lane.b32.xlu0 %v462, 64
    %v1003 = vpop.permute.xlu0 %1002
    %v1005 = vrot.slane %v776, 6
    %v1007 = vsel %vm156, %v1003, %v1005
    %1008 = vrot.lane.b32.xlu0 %v569, 64
    %v1009 = vpop.permute.xlu0 %1008
    %v1011 = vrot.slane %v670, 2
    %v1013 = vsel %vm156, %v1009, %v1011
    %v1016 = vsel %vm156, %v675, %v573
    %1017 = vrot.lane.b32.xlu0 %v776, 64
    %v1018 = vpop.permute.xlu0 %1017
    %v1020 = vrot.slane %v462, 2
    %v1022 = vsel %vm156, %v1018, %v1020
    %1023 = vrot.lane.b32.xlu0 %v883, 64
    %v1024 = vpop.permute.xlu0 %1023
    %v1026 = vrot.slane %v355, 6
    %v1028 = vsel %vm156, %v1024, %v1026
    %1029 = vrot.lane.b32.xlu0 %v990, 64
    %v1030 = vpop.permute.xlu0 %1029
    %v1032 = vrot.slane %v249, 2
    %v1034 = vsel %vm156, %v1030, %v1032
    %vm1035 = vcmask 1041408
    %v1036 = vsel %vm1035, %v995, %v1001
    %vm1037 = vcmask 1043456
    %v1038 = vsel %vm1037, %v1036, %v1007
    %vm1039 = vcmask 1045504
    %v1040 = vsel %vm1039, %v1038, %v1013
    %v1041 = vsel %vm1035, %v1016, %v1022
    %v1042 = vsel %vm1037, %v1041, %v1028
    %v1043 = vsel %vm1039, %v1042, %v1034
    %v1044 = vld [vmem:[#allocation3] sm:$0xff]
    %v1045 = vld [vmem:[#allocation3 + $0x8] sm:$0xff]
    %v1046 = vld [vmem:[#allocation3 + $0x10] sm:$0xff]
    %v1047 = vld [vmem:[#allocation3 + $0x18] sm:$0xff]
    %v1048 = vld [vmem:[#allocation3 + $0x20] sm:$0xff]
    %v1049 = vld [vmem:[#allocation3 + $0x28] sm:$0xff]
    %v1050 = vld [vmem:[#allocation3 + $0x30] sm:$0xff]
    %v1051 = vld [vmem:[#allocation3 + $0x38] sm:$0xff]
    %v1052 = vld [vmem:[#allocation3 + $0x40] sm:$0xff]
    %v1053 = vld [vmem:[#allocation3 + $0x48] sm:$0xff]
    %v1054 = vld [vmem:[#allocation3 + $0x50] sm:$0xff]
    %v1055 = vld [vmem:[#allocation3 + $0x58] sm:$0xff]
    %v1056 = vld [vmem:[#allocation3 + $0x60] sm:$0xff]
    %v1057 = vld [vmem:[#allocation3 + $0x68] sm:$0xff]
    %v1058 = vld [vmem:[#allocation3 + $0x70] sm:$0xff]
    %v1059 = vld [vmem:[#allocation3 + $0x78] sm:$0xff]
    %v1060 = vld [vmem:[#allocation3 + $0x80] sm:$0xff]
    %v1061 = vld [vmem:[#allocation3 + $0x88] sm:$0xff]
    %v1062 = vld [vmem:[#allocation3 + $0x90] sm:$0xff]
    %v1063 = vld [vmem:[#allocation3 + $0x98] sm:$0xff]
    %v1064 = vld [vmem:[#allocation3 + $0xa0] sm:$0xff]
    %v1065 = vld [vmem:[#allocation3 + $0xa8] sm:$0xff]
    %v1066 = vld [vmem:[#allocation3 + $0xb0] sm:$0xff]
    %v1067 = vld [vmem:[#allocation3 + $0xb8] sm:$0xff]
    %v1068 = vld [vmem:[#allocation3 + $0xc0] sm:$0xff]
    %v1069 = vld [vmem:[#allocation3 + $0xc8] sm:$0xff]
    %v1070 = vld [vmem:[#allocation3 + $0xd0] sm:$0xff]
    %v1071 = vld [vmem:[#allocation3 + $0xd8] sm:$0xff]
    %v1072 = vld [vmem:[#allocation3 + $0xe0] sm:$0xff]
    %v1073 = vld [vmem:[#allocation3 + $0xe8] sm:$0xff]
    %v1074 = vld [vmem:[#allocation3 + $0xf0] sm:$0xff]
    %v1075 = vld [vmem:[#allocation3 + $0xf8] sm:$0xff]
    %v1076 = vld [vmem:[#allocation6] sm:$0xff]
    %v1077 = vld [vmem:[#allocation6 + $0x8] sm:$0xff]
    %v1078 = vld [vmem:[#allocation6 + $0x10] sm:$0xff]
    %v1079 = vld [vmem:[#allocation6 + $0x18] sm:$0xff]
    %v1080 = vld [vmem:[#allocation6 + $0x20] sm:$0xff]
    %v1081 = vld [vmem:[#allocation6 + $0x28] sm:$0xff]
    %v1082 = vld [vmem:[#allocation6 + $0x30] sm:$0xff]
    %v1083 = vld [vmem:[#allocation6 + $0x38] sm:$0xff]
    %v1084 = vld [vmem:[#allocation6 + $0x40] sm:$0xff]
    %v1085 = vld [vmem:[#allocation6 + $0x48] sm:$0xff]
    %v1086 = vld [vmem:[#allocation6 + $0x50] sm:$0xff]
    %v1087 = vld [vmem:[#allocation6 + $0x58] sm:$0xff]
    %v1088 = vld [vmem:[#allocation6 + $0x60] sm:$0xff]
    %v1089 = vld [vmem:[#allocation6 + $0x68] sm:$0xff]
    %v1090 = vld [vmem:[#allocation6 + $0x70] sm:$0xff]
    %v1091 = vld [vmem:[#allocation6 + $0x78] sm:$0xff]
    %v1092 = vld [vmem:[%s6] sm:$0x3]
    %v1094 = vperm.slane %v1092, 0
    %v1095 = vperm.slane %v1092, 1
    %1098 = vmatpush.msra.mxu0 %v1074
    %1099 = vmatpush.msra.mxu0 %v1072
    %1100 = vmatpush.msra.mxu0 %v1070
    %1101 = vmatpush.msra.mxu0 %v1068
    %1102 = vmatpush.msra.mxu0 %v1066
    %1103 = vmatpush.msra.mxu0 %v1064
    %1104 = vmatpush.msra.mxu0 %v1062
    %1105 = vmatpush.msra.mxu0 %v1060
    %1106 = vmatpush.msra.mxu0 %v1058
    %1107 = vmatpush.msra.mxu0 %v1056
    %1108 = vmatpush.msra.mxu0 %v1054
    %1109 = vmatpush.msra.mxu0 %v1052
    %1110 = vmatpush.msra.mxu0 %v1050
    %1111 = vmatpush.msra.mxu0 %v1048
    %1112 = vmatpush.msra.mxu0 %v1046
    %1113 = vmatpush.msra.mxu0 %v1044
    %1114 = vmatmul.f32.gmra.mxu0 %v1040
    %v1115 = vpop.f32.mrf.mxu0
    %v1116 = vadd.f32 %v1094, %v1115
    %1117 = vmatmul.f32.gmra.mxu0 %v1043
    %v1118 = vpop.f32.mrf.mxu0
    %v1119 = vadd.f32 %v1094, %v1118
    %1120 = vdwg.mxu0
    %1121 = vmatpush.msra.mxu0 %v1075
    %1122 = vmatpush.msra.mxu0 %v1073
    %1123 = vmatpush.msra.mxu0 %v1071
    %1124 = vmatpush.msra.mxu0 %v1069
    %1125 = vmatpush.msra.mxu0 %v1067
    %1126 = vmatpush.msra.mxu0 %v1065
    %1127 = vmatpush.msra.mxu0 %v1063
    %1128 = vmatpush.msra.mxu0 %v1061
    %1129 = vmatpush.msra.mxu0 %v1059
    %1130 = vmatpush.msra.mxu0 %v1057
    %1131 = vmatpush.msra.mxu0 %v1055
    %1132 = vmatpush.msra.mxu0 %v1053
    %1133 = vmatpush.msra.mxu0 %v1051
    %1134 = vmatpush.msra.mxu0 %v1049
    %1135 = vmatpush.msra.mxu0 %v1047
    %1136 = vmatpush.msra.mxu0 %v1045
    %1137 = vmatmul.f32.gmra.mxu0 %v1040
    %v1138 = vpop.f32.mrf.mxu0
    %v1139 = vadd.f32 %v1095, %v1138
    %1140 = vmatmul.f32.gmra.mxu0 %v1043
    %v1141 = vpop.f32.mrf.mxu0
    %v1142 = vadd.f32 %v1095, %v1141
    %1143 = vdwg.mxu0
    %1144 = vst [vmem:[#allocation2] sm:$0xff] %v1116
    %1145 = vst [vmem:[#allocation2 + $0x8] sm:$0xff] %v1139
    %1146 = vst [vmem:[#allocation2 + $0x10] sm:$0xff] %v1119
    %1147 = vst [vmem:[#allocation2 + $0x18] sm:$0xff] %v1142
    %v1148 = vld [vmem:[#allocation2] sm:$0x3]
    %v1149 = vld [vmem:[#allocation2 + $0x8] sm:$0x3]
    %1150 = vmatpush.msra.mxu0 0.0
    %1151 = vmatpush.msra.mxu0 0.0
    %1152 = vmatpush.msra.mxu0 0.0
    %1153 = vmatpush.msra.mxu0 0.0
    %1154 = vmatpush.msra.mxu0 0.0
    %1155 = vmatpush.msra.mxu0 0.0
    %1156 = vmatpush.msra.mxu0 0.0
    %1157 = vmatpush.msra.mxu0 0.0
    %1158 = vmatpush.msra.mxu0 %v1090
    %1159 = vmatpush.msra.mxu0 %v1088
    %1160 = vmatpush.msra.mxu0 %v1086
    %1161 = vmatpush.msra.mxu0 %v1084
    %1162 = vmatpush.msra.mxu0 %v1082
    %1163 = vmatpush.msra.mxu0 %v1080
    %1164 = vmatpush.msra.mxu0 %v1078
    %1165 = vmatpush.msra.mxu0 %v1076
    %1166 = vmatmul.f32.gmra.mxu0 %v158
    %v1167 = vpop.f32.mrf.mxu0
    %v1168 = vadd.f32 0.0, %v1167
    %1169 = vdwg.mxu0
    %1170 = vmatpush.msra.mxu0 0.0
    %1171 = vmatpush.msra.mxu0 0.0
    %1172 = vmatpush.msra.mxu0 0.0
    %1173 = vmatpush.msra.mxu0 0.0
    %1174 = vmatpush.msra.mxu0 0.0
    %1175 = vmatpush.msra.mxu0 0.0
    %1176 = vmatpush.msra.mxu0 0.0
    %1177 = vmatpush.msra.mxu0 0.0
    %1178 = vmatpush.msra.mxu0 %v1091
    %1179 = vmatpush.msra.mxu0 %v1089
    %1180 = vmatpush.msra.mxu0 %v1087
    %1181 = vmatpush.msra.mxu0 %v1085
    %1182 = vmatpush.msra.mxu0 %v1083
    %1183 = vmatpush.msra.mxu0 %v1081
    %1184 = vmatpush.msra.mxu0 %v1079
    %1185 = vmatpush.msra.mxu0 %v1077
    %1186 = vmatmul.f32.gmra.mxu0 %v158
    %v1187 = vpop.f32.mrf.mxu0
    %v1188 = vadd.f32 0.0, %v1187
    %1189 = vdwg.mxu0
    %v1190 = vadd.f32 %v1148, %v1168
    %v1191 = vadd.f32 %v1149, %v1188
    %v1192 = vxor.u32 %v1190, 2147483648
    %v1193 = vmul.f32 %v1192, 1.442695
    %v1194 = vpow.pop %v1193
    %v1195 = vadd.f32 %v1194, 1.0
    %v1196 = vrcp.pop %v1195
    %v1197 = vmul.f32 %v1195, %v1196
    %v1198 = vsub.f32 1.0, %v1197
    %v1199 = vmul.f32 %v1196, %v1198
    %v1200 = vadd.f32 %v1196, %v1199
    %vm1201 = vweird.f32 %v1195
    %vm1202 = vweird.f32 %v1196
    %vm1203 = vmor %vm1201, %vm1202
    %v1204 = vsel %vm1203, %v1196, %v1200
    %v1205 = vand.u32 2147483647, %v1195
    %vm1206 = vcmp.eq.f32.partialorder %v1205, 8.507059e+37
    %v1207 = vand.u32 %v1195, 2147483648
    %v1208 = vor.u32 1.1754944e-38, %v1207
    %v1209 = vsel %vm1206, %v1208, %v1204
    %v1210 = vmul.f32 1.0, %v1209
    %v1211 = vtanh.pop %v1191
    %v1212 = vxor.u32 %v1191, 2147483648
    %v1213 = vmul.f32 %v1212, 1.442695
    %v1214 = vpow.pop %v1213
    %v1215 = vadd.f32 %v1214, 1.0
    %v1216 = vrcp.pop %v1215
    %v1217 = vmul.f32 %v1215, %v1216
    %v1218 = vsub.f32 1.0, %v1217
    %v1219 = vmul.f32 %v1216, %v1218
    %v1220 = vadd.f32 %v1216, %v1219
    %vm1221 = vweird.f32 %v1215
    %vm1222 = vweird.f32 %v1216
    %vm1223 = vmor %vm1221, %vm1222
    %v1224 = vsel %vm1223, %v1216, %v1220
    %v1225 = vand.u32 2147483647, %v1215
    %vm1226 = vcmp.eq.f32.partialorder %v1225, 8.507059e+37
    %v1227 = vand.u32 %v1215, 2147483648
    %v1228 = vor.u32 1.1754944e-38, %v1227
    %v1229 = vsel %vm1226, %v1228, %v1224
    %v1230 = vmul.f32 1.0, %v1229
    %v1231 = vmul.f32 %v1210, 0.0
    %v1232 = vmul.f32 %v1210, %v1211
    %1234 = vrot.lane.b32.xlu0 %v1232, 64
    %v1235 = vpop.permute.xlu0 %1234
    %v1237 = vadd.f32 %v1231, %v1235
    %v1238 = vtanh.pop %v1237
    %v1239 = vmul.f32 %v1230, %v1238
    %v1240 = vld [vmem:[#allocation2] sm:$0xc]
    %v1241 = vld [vmem:[#allocation2 + $0x8] sm:$0xc]
    %1243 = vrot.lane.b32.xlu0 %v1239, 64
    %v1244 = vpop.permute.xlu0 %1243
    %v1245 = vsel %vm156, %v1244, 0
    %1247 = vmatpush.msra.mxu0 0.0
    %1248 = vmatpush.msra.mxu0 0.0
    %1249 = vmatpush.msra.mxu0 0.0
    %1250 = vmatpush.msra.mxu0 0.0
    %1251 = vmatpush.msra.mxu0 0.0
    %1252 = vmatpush.msra.mxu0 0.0
    %1253 = vmatpush.msra.mxu0 0.0
    %1254 = vmatpush.msra.mxu0 0.0
    %1255 = vmatpush.msra.mxu0 %v1090
    %1256 = vmatpush.msra.mxu0 %v1088
    %1257 = vmatpush.msra.mxu0 %v1086
    %1258 = vmatpush.msra.mxu0 %v1084
    %1259 = vmatpush.msra.mxu0 %v1082
    %1260 = vmatpush.msra.mxu0 %v1080
    %1261 = vmatpush.msra.mxu0 %v1078
    %1262 = vmatpush.msra.mxu0 %v1076
    %1263 = vmatmul.f32.gmra.mxu0 %v1245
    %v1264 = vpop.f32.mrf.mxu0
    %v1265 = vadd.f32 0.0, %v1264
    %1266 = vdwg.mxu0
    %1267 = vmatpush.msra.mxu0 0.0
    %1268 = vmatpush.msra.mxu0 0.0
    %1269 = vmatpush.msra.mxu0 0.0
    %1270 = vmatpush.msra.mxu0 0.0
    %1271 = vmatpush.msra.mxu0 0.0
    %1272 = vmatpush.msra.mxu0 0.0
    %1273 = vmatpush.msra.mxu0 0.0
    %1274 = vmatpush.msra.mxu0 0.0
    %1275 = vmatpush.msra.mxu0 %v1091
    %1276 = vmatpush.msra.mxu0 %v1089
    %1277 = vmatpush.msra.mxu0 %v1087
    %1278 = vmatpush.msra.mxu0 %v1085
    %1279 = vmatpush.msra.mxu0 %v1083
    %1280 = vmatpush.msra.mxu0 %v1081
    %1281 = vmatpush.msra.mxu0 %v1079
    %1282 = vmatpush.msra.mxu0 %v1077
    %1283 = vmatmul.f32.gmra.mxu0 %v1245
    %v1284 = vpop.f32.mrf.mxu0
    %v1285 = vadd.f32 0.0, %v1284
    %1286 = vdwg.mxu0
    %v1289 = vrot.slane %v1265, 6
    %v1290 = vrot.slane %v1285, 6
    %v1293 = vadd.f32 %v1240, %v1289
    %v1294 = vadd.f32 %v1241, %v1290
    %v1295 = vxor.u32 %v1293, 2147483648
    %v1296 = vmul.f32 %v1295, 1.442695
    %v1297 = vpow.pop %v1296
    %v1298 = vadd.f32 %v1297, 1.0
    %v1299 = vrcp.pop %v1298
    %v1300 = vmul.f32 %v1298, %v1299
    %v1301 = vsub.f32 1.0, %v1300
    %v1302 = vmul.f32 %v1299, %v1301
    %v1303 = vadd.f32 %v1299, %v1302
    %vm1304 = vweird.f32 %v1298
    %vm1305 = vweird.f32 %v1299
    %vm1306 = vmor %vm1304, %vm1305
    %v1307 = vsel %vm1306, %v1299, %v1303
    %v1308 = vand.u32 2147483647, %v1298
    %vm1309 = vcmp.eq.f32.partialorder %v1308, 8.507059e+37
    %v1310 = vand.u32 %v1298, 2147483648
    %v1311 = vor.u32 1.1754944e-38, %v1310
    %v1312 = vsel %vm1309, %v1311, %v1307
    %v1313 = vmul.f32 1.0, %v1312
    %v1314 = vtanh.pop %v1294
    %v1315 = vxor.u32 %v1294, 2147483648
    %v1316 = vmul.f32 %v1315, 1.442695
    %v1317 = vpow.pop %v1316
    %v1318 = vadd.f32 %v1317, 1.0
    %v1319 = vrcp.pop %v1318
    %v1320 = vmul.f32 %v1318, %v1319
    %v1321 = vsub.f32 1.0, %v1320
    %v1322 = vmul.f32 %v1319, %v1321
    %v1323 = vadd.f32 %v1319, %v1322
    %vm1324 = vweird.f32 %v1318
    %vm1325 = vweird.f32 %v1319
    %vm1326 = vmor %vm1324, %vm1325
    %v1327 = vsel %vm1326, %v1319, %v1323
    %v1328 = vand.u32 2147483647, %v1318
    %vm1329 = vcmp.eq.f32.partialorder %v1328, 8.507059e+37
    %v1330 = vand.u32 %v1318, 2147483648
    %v1331 = vor.u32 1.1754944e-38, %v1330
    %v1332 = vsel %vm1329, %v1331, %v1327
    %v1333 = vmul.f32 1.0, %v1332
    %v1335 = vrot.slane %v1237, 6
    %v1337 = vmul.f32 %v1313, %v1335
    %v1338 = vmul.f32 %v1313, %v1314
    %1340 = vrot.lane.b32.xlu0 %v1338, 64
    %v1341 = vpop.permute.xlu0 %1340
    %v1343 = vadd.f32 %v1337, %v1341
    %v1344 = vtanh.pop %v1343
    %v1345 = vmul.f32 %v1333, %v1344
    %v1346 = vld [vmem:[#allocation2] sm:$0x30]
    %v1347 = vld [vmem:[#allocation2 + $0x8] sm:$0x30]
    %v1349 = vrot.slane %v1345, 2
    %1350 = vrot.lane.b32.xlu0 %v1349, 64
    %v1351 = vpop.permute.xlu0 %1350
    %v1352 = vsel %vm156, %v1351, 0
    %1354 = vmatpush.msra.mxu0 0.0
    %1355 = vmatpush.msra.mxu0 0.0
    %1356 = vmatpush.msra.mxu0 0.0
    %1357 = vmatpush.msra.mxu0 0.0
    %1358 = vmatpush.msra.mxu0 0.0
    %1359 = vmatpush.msra.mxu0 0.0
    %1360 = vmatpush.msra.mxu0 0.0
    %1361 = vmatpush.msra.mxu0 0.0
    %1362 = vmatpush.msra.mxu0 %v1090
    %1363 = vmatpush.msra.mxu0 %v1088
    %1364 = vmatpush.msra.mxu0 %v1086
    %1365 = vmatpush.msra.mxu0 %v1084
    %1366 = vmatpush.msra.mxu0 %v1082
    %1367 = vmatpush.msra.mxu0 %v1080
    %1368 = vmatpush.msra.mxu0 %v1078
    %1369 = vmatpush.msra.mxu0 %v1076
    %1370 = vmatmul.f32.gmra.mxu0 %v1352
    %v1371 = vpop.f32.mrf.mxu0
    %v1372 = vadd.f32 0.0, %v1371
    %1373 = vdwg.mxu0
    %1374 = vmatpush.msra.mxu0 0.0
    %1375 = vmatpush.msra.mxu0 0.0
    %1376 = vmatpush.msra.mxu0 0.0
    %1377 = vmatpush.msra.mxu0 0.0
    %1378 = vmatpush.msra.mxu0 0.0
    %1379 = vmatpush.msra.mxu0 0.0
    %1380 = vmatpush.msra.mxu0 0.0
    %1381 = vmatpush.msra.mxu0 0.0
    %1382 = vmatpush.msra.mxu0 %v1091
    %1383 = vmatpush.msra.mxu0 %v1089
    %1384 = vmatpush.msra.mxu0 %v1087
    %1385 = vmatpush.msra.mxu0 %v1085
    %1386 = vmatpush.msra.mxu0 %v1083
    %1387 = vmatpush.msra.mxu0 %v1081
    %1388 = vmatpush.msra.mxu0 %v1079
    %1389 = vmatpush.msra.mxu0 %v1077
    %1390 = vmatmul.f32.gmra.mxu0 %v1352
    %v1391 = vpop.f32.mrf.mxu0
    %v1392 = vadd.f32 0.0, %v1391
    %1393 = vdwg.mxu0
    %v1396 = vrot.slane %v1372, 4
    %v1397 = vrot.slane %v1392, 4
    %v1400 = vadd.f32 %v1346, %v1396
    %v1401 = vadd.f32 %v1347, %v1397
    %v1402 = vxor.u32 %v1400, 2147483648
    %v1403 = vmul.f32 %v1402, 1.442695
    %v1404 = vpow.pop %v1403
    %v1405 = vadd.f32 %v1404, 1.0
    %v1406 = vrcp.pop %v1405
    %v1407 = vmul.f32 %v1405, %v1406
    %v1408 = vsub.f32 1.0, %v1407
    %v1409 = vmul.f32 %v1406, %v1408
    %v1410 = vadd.f32 %v1406, %v1409
    %vm1411 = vweird.f32 %v1405
    %vm1412 = vweird.f32 %v1406
    %vm1413 = vmor %vm1411, %vm1412
    %v1414 = vsel %vm1413, %v1406, %v1410
    %v1415 = vand.u32 2147483647, %v1405
    %vm1416 = vcmp.eq.f32.partialorder %v1415, 8.507059e+37
    %v1417 = vand.u32 %v1405, 2147483648
    %v1418 = vor.u32 1.1754944e-38, %v1417
    %v1419 = vsel %vm1416, %v1418, %v1414
    %v1420 = vmul.f32 1.0, %v1419
    %v1421 = vtanh.pop %v1401
    %v1422 = vxor.u32 %v1401, 2147483648
    %v1423 = vmul.f32 %v1422, 1.442695
    %v1424 = vpow.pop %v1423
    %v1425 = vadd.f32 %v1424, 1.0
    %v1426 = vrcp.pop %v1425
    %v1427 = vmul.f32 %v1425, %v1426
    %v1428 = vsub.f32 1.0, %v1427
    %v1429 = vmul.f32 %v1426, %v1428
    %v1430 = vadd.f32 %v1426, %v1429
    %vm1431 = vweird.f32 %v1425
    %vm1432 = vweird.f32 %v1426
    %vm1433 = vmor %vm1431, %vm1432
    %v1434 = vsel %vm1433, %v1426, %v1430
    %v1435 = vand.u32 2147483647, %v1425
    %vm1436 = vcmp.eq.f32.partialorder %v1435, 8.507059e+37
    %v1437 = vand.u32 %v1425, 2147483648
    %v1438 = vor.u32 1.1754944e-38, %v1437
    %v1439 = vsel %vm1436, %v1438, %v1434
    %v1440 = vmul.f32 1.0, %v1439
    %v1442 = vrot.slane %v1343, 6
    %v1444 = vmul.f32 %v1420, %v1442
    %v1445 = vmul.f32 %v1420, %v1421
    %1447 = vrot.lane.b32.xlu0 %v1445, 64
    %v1448 = vpop.permute.xlu0 %1447
    %v1450 = vadd.f32 %v1444, %v1448
    %v1451 = vtanh.pop %v1450
    %v1452 = vmul.f32 %v1440, %v1451
    %v1453 = vld [vmem:[#allocation2] sm:$0xc0]
    %v1454 = vld [vmem:[#allocation2 + $0x8] sm:$0xc0]
    %v1456 = vrot.slane %v1452, 4
    %1457 = vrot.lane.b32.xlu0 %v1456, 64
    %v1458 = vpop.permute.xlu0 %1457
    %v1459 = vsel %vm156, %v1458, 0
    %1461 = vmatpush.msra.mxu0 0.0
    %1462 = vmatpush.msra.mxu0 0.0
    %1463 = vmatpush.msra.mxu0 0.0
    %1464 = vmatpush.msra.mxu0 0.0
    %1465 = vmatpush.msra.mxu0 0.0
    %1466 = vmatpush.msra.mxu0 0.0
    %1467 = vmatpush.msra.mxu0 0.0
    %1468 = vmatpush.msra.mxu0 0.0
    %1469 = vmatpush.msra.mxu0 %v1090
    %1470 = vmatpush.msra.mxu0 %v1088
    %1471 = vmatpush.msra.mxu0 %v1086
    %1472 = vmatpush.msra.mxu0 %v1084
    %1473 = vmatpush.msra.mxu0 %v1082
    %1474 = vmatpush.msra.mxu0 %v1080
    %1475 = vmatpush.msra.mxu0 %v1078
    %1476 = vmatpush.msra.mxu0 %v1076
    %1477 = vmatmul.f32.gmra.mxu0 %v1459
    %v1478 = vpop.f32.mrf.mxu0
    %v1479 = vadd.f32 0.0, %v1478
    %1480 = vdwg.mxu0
    %1481 = vmatpush.msra.mxu0 0.0
    %1482 = vmatpush.msra.mxu0 0.0
    %1483 = vmatpush.msra.mxu0 0.0
    %1484 = vmatpush.msra.mxu0 0.0
    %1485 = vmatpush.msra.mxu0 0.0
    %1486 = vmatpush.msra.mxu0 0.0
    %1487 = vmatpush.msra.mxu0 0.0
    %1488 = vmatpush.msra.mxu0 0.0
    %1489 = vmatpush.msra.mxu0 %v1091
    %1490 = vmatpush.msra.mxu0 %v1089
    %1491 = vmatpush.msra.mxu0 %v1087
    %1492 = vmatpush.msra.mxu0 %v1085
    %1493 = vmatpush.msra.mxu0 %v1083
    %1494 = vmatpush.msra.mxu0 %v1081
    %1495 = vmatpush.msra.mxu0 %v1079
    %1496 = vmatpush.msra.mxu0 %v1077
    %1497 = vmatmul.f32.gmra.mxu0 %v1459
    %v1498 = vpop.f32.mrf.mxu0
    %v1499 = vadd.f32 0.0, %v1498
    %1500 = vdwg.mxu0
    %v1503 = vrot.slane %v1479, 2
    %v1504 = vrot.slane %v1499, 2
    %v1507 = vadd.f32 %v1453, %v1503
    %v1508 = vadd.f32 %v1454, %v1504
    %v1509 = vxor.u32 %v1507, 2147483648
    %v1510 = vmul.f32 %v1509, 1.442695
    %v1511 = vpow.pop %v1510
    %v1512 = vadd.f32 %v1511, 1.0
    %v1513 = vrcp.pop %v1512
    %v1514 = vmul.f32 %v1512, %v1513
    %v1515 = vsub.f32 1.0, %v1514
    %v1516 = vmul.f32 %v1513, %v1515
    %v1517 = vadd.f32 %v1513, %v1516
    %vm1518 = vweird.f32 %v1512
    %vm1519 = vweird.f32 %v1513
    %vm1520 = vmor %vm1518, %vm1519
    %v1521 = vsel %vm1520, %v1513, %v1517
    %v1522 = vand.u32 2147483647, %v1512
    %vm1523 = vcmp.eq.f32.partialorder %v1522, 8.507059e+37
    %v1524 = vand.u32 %v1512, 2147483648
    %v1525 = vor.u32 1.1754944e-38, %v1524
    %v1526 = vsel %vm1523, %v1525, %v1521
    %v1527 = vmul.f32 1.0, %v1526
    %v1528 = vtanh.pop %v1508
    %v1529 = vxor.u32 %v1508, 2147483648
    %v1530 = vmul.f32 %v1529, 1.442695
    %v1531 = vpow.pop %v1530
    %v1532 = vadd.f32 %v1531, 1.0
    %v1533 = vrcp.pop %v1532
    %v1534 = vmul.f32 %v1532, %v1533
    %v1535 = vsub.f32 1.0, %v1534
    %v1536 = vmul.f32 %v1533, %v1535
    %v1537 = vadd.f32 %v1533, %v1536
    %vm1538 = vweird.f32 %v1532
    %vm1539 = vweird.f32 %v1533
    %vm1540 = vmor %vm1538, %vm1539
    %v1541 = vsel %vm1540, %v1533, %v1537
    %v1542 = vand.u32 2147483647, %v1532
    %vm1543 = vcmp.eq.f32.partialorder %v1542, 8.507059e+37
    %v1544 = vand.u32 %v1532, 2147483648
    %v1545 = vor.u32 1.1754944e-38, %v1544
    %v1546 = vsel %vm1543, %v1545, %v1541
    %v1547 = vmul.f32 1.0, %v1546
    %v1549 = vrot.slane %v1450, 6
    %v1551 = vmul.f32 %v1527, %v1549
    %v1552 = vmul.f32 %v1527, %v1528
    %1554 = vrot.lane.b32.xlu0 %v1552, 64
    %v1555 = vpop.permute.xlu0 %1554
    %v1557 = vadd.f32 %v1551, %v1555
    %v1558 = vtanh.pop %v1557
    %v1559 = vmul.f32 %v1547, %v1558
    %v1560 = vld [vmem:[#allocation2 + $0x10] sm:$0x3]
    %v1561 = vld [vmem:[#allocation2 + $0x18] sm:$0x3]
    %v1563 = vrot.slane %v1559, 6
    %1564 = vrot.lane.b32.xlu0 %v1563, 64
    %v1565 = vpop.permute.xlu0 %1564
    %v1566 = vsel %vm156, %v1565, 0
    %1568 = vmatpush.msra.mxu0 0.0
    %1569 = vmatpush.msra.mxu0 0.0
    %1570 = vmatpush.msra.mxu0 0.0
    %1571 = vmatpush.msra.mxu0 0.0
    %1572 = vmatpush.msra.mxu0 0.0
    %1573 = vmatpush.msra.mxu0 0.0
    %1574 = vmatpush.msra.mxu0 0.0
    %1575 = vmatpush.msra.mxu0 0.0
    %1576 = vmatpush.msra.mxu0 %v1090
    %1577 = vmatpush.msra.mxu0 %v1088
    %1578 = vmatpush.msra.mxu0 %v1086
    %1579 = vmatpush.msra.mxu0 %v1084
    %1580 = vmatpush.msra.mxu0 %v1082
    %1581 = vmatpush.msra.mxu0 %v1080
    %1582 = vmatpush.msra.mxu0 %v1078
    %1583 = vmatpush.msra.mxu0 %v1076
    %1584 = vmatmul.f32.gmra.mxu0 %v1566
    %v1585 = vpop.f32.mrf.mxu0
    %v1586 = vadd.f32 0.0, %v1585
    %1587 = vdwg.mxu0
    %1588 = vmatpush.msra.mxu0 0.0
    %1589 = vmatpush.msra.mxu0 0.0
    %1590 = vmatpush.msra.mxu0 0.0
    %1591 = vmatpush.msra.mxu0 0.0
    %1592 = vmatpush.msra.mxu0 0.0
    %1593 = vmatpush.msra.mxu0 0.0
    %1594 = vmatpush.msra.mxu0 0.0
    %1595 = vmatpush.msra.mxu0 0.0
    %1596 = vmatpush.msra.mxu0 %v1091
    %1597 = vmatpush.msra.mxu0 %v1089
    %1598 = vmatpush.msra.mxu0 %v1087
    %1599 = vmatpush.msra.mxu0 %v1085
    %1600 = vmatpush.msra.mxu0 %v1083
    %1601 = vmatpush.msra.mxu0 %v1081
    %1602 = vmatpush.msra.mxu0 %v1079
    %1603 = vmatpush.msra.mxu0 %v1077
    %1604 = vmatmul.f32.gmra.mxu0 %v1566
    %v1605 = vpop.f32.mrf.mxu0
    %v1606 = vadd.f32 0.0, %v1605
    %1607 = vdwg.mxu0
    %v1608 = vadd.f32 %v1560, %v1586
    %v1609 = vadd.f32 %v1561, %v1606
    %v1610 = vxor.u32 %v1608, 2147483648
    %v1611 = vmul.f32 %v1610, 1.442695
    %v1612 = vpow.pop %v1611
    %v1613 = vadd.f32 %v1612, 1.0
    %v1614 = vrcp.pop %v1613
    %v1615 = vmul.f32 %v1613, %v1614
    %v1616 = vsub.f32 1.0, %v1615
    %v1617 = vmul.f32 %v1614, %v1616
    %v1618 = vadd.f32 %v1614, %v1617
    %vm1619 = vweird.f32 %v1613
    %vm1620 = vweird.f32 %v1614
    %vm1621 = vmor %vm1619, %vm1620
    %v1622 = vsel %vm1621, %v1614, %v1618
    %v1623 = vand.u32 2147483647, %v1613
    %vm1624 = vcmp.eq.f32.partialorder %v1623, 8.507059e+37
    %v1625 = vand.u32 %v1613, 2147483648
    %v1626 = vor.u32 1.1754944e-38, %v1625
    %v1627 = vsel %vm1624, %v1626, %v1622
    %v1628 = vmul.f32 1.0, %v1627
    %v1629 = vtanh.pop %v1609
    %v1630 = vxor.u32 %v1609, 2147483648
    %v1631 = vmul.f32 %v1630, 1.442695
    %v1632 = vpow.pop %v1631
    %v1633 = vadd.f32 %v1632, 1.0
    %v1634 = vrcp.pop %v1633
    %v1635 = vmul.f32 %v1633, %v1634
    %v1636 = vsub.f32 1.0, %v1635
    %v1637 = vmul.f32 %v1634, %v1636
    %v1638 = vadd.f32 %v1634, %v1637
    %vm1639 = vweird.f32 %v1633
    %vm1640 = vweird.f32 %v1634
    %vm1641 = vmor %vm1639, %vm1640
    %v1642 = vsel %vm1641, %v1634, %v1638
    %v1643 = vand.u32 2147483647, %v1633
    %vm1644 = vcmp.eq.f32.partialorder %v1643, 8.507059e+37
    %v1645 = vand.u32 %v1633, 2147483648
    %v1646 = vor.u32 1.1754944e-38, %v1645
    %v1647 = vsel %vm1644, %v1646, %v1642
    %v1648 = vmul.f32 1.0, %v1647
    %v1650 = vrot.slane %v1557, 6
    %v1652 = vmul.f32 %v1628, %v1650
    %v1653 = vmul.f32 %v1628, %v1629
    %1655 = vrot.lane.b32.xlu0 %v1653, 64
    %v1656 = vpop.permute.xlu0 %1655
    %v1658 = vadd.f32 %v1652, %v1656
    %v1659 = vtanh.pop %v1658
    %v1660 = vmul.f32 %v1648, %v1659
    %v1661 = vld [vmem:[#allocation2 + $0x10] sm:$0xc]
    %v1662 = vld [vmem:[#allocation2 + $0x18] sm:$0xc]
    %1664 = vrot.lane.b32.xlu0 %v1660, 64
    %v1665 = vpop.permute.xlu0 %1664
    %v1666 = vsel %vm156, %v1665, 0
    %1668 = vmatpush.msra.mxu0 0.0
    %1669 = vmatpush.msra.mxu0 0.0
    %1670 = vmatpush.msra.mxu0 0.0
    %1671 = vmatpush.msra.mxu0 0.0
    %1672 = vmatpush.msra.mxu0 0.0
    %1673 = vmatpush.msra.mxu0 0.0
    %1674 = vmatpush.msra.mxu0 0.0
    %1675 = vmatpush.msra.mxu0 0.0
    %1676 = vmatpush.msra.mxu0 %v1090
    %1677 = vmatpush.msra.mxu0 %v1088
    %1678 = vmatpush.msra.mxu0 %v1086
    %1679 = vmatpush.msra.mxu0 %v1084
    %1680 = vmatpush.msra.mxu0 %v1082
    %1681 = vmatpush.msra.mxu0 %v1080
    %1682 = vmatpush.msra.mxu0 %v1078
    %1683 = vmatpush.msra.mxu0 %v1076
    %1684 = vmatmul.f32.gmra.mxu0 %v1666
    %v1685 = vpop.f32.mrf.mxu0
    %v1686 = vadd.f32 0.0, %v1685
    %1687 = vdwg.mxu0
    %1688 = vmatpush.msra.mxu0 0.0
    %1689 = vmatpush.msra.mxu0 0.0
    %1690 = vmatpush.msra.mxu0 0.0
    %1691 = vmatpush.msra.mxu0 0.0
    %1692 = vmatpush.msra.mxu0 0.0
    %1693 = vmatpush.msra.mxu0 0.0
    %1694 = vmatpush.msra.mxu0 0.0
    %1695 = vmatpush.msra.mxu0 0.0
    %1696 = vmatpush.msra.mxu0 %v1091
    %1697 = vmatpush.msra.mxu0 %v1089
    %1698 = vmatpush.msra.mxu0 %v1087
    %1699 = vmatpush.msra.mxu0 %v1085
    %1700 = vmatpush.msra.mxu0 %v1083
    %1701 = vmatpush.msra.mxu0 %v1081
    %1702 = vmatpush.msra.mxu0 %v1079
    %1703 = vmatpush.msra.mxu0 %v1077
    %1704 = vmatmul.f32.gmra.mxu0 %v1666
    %v1705 = vpop.f32.mrf.mxu0
    %v1706 = vadd.f32 0.0, %v1705
    %1707 = vdwg.mxu0
    %v1710 = vrot.slane %v1686, 6
    %v1711 = vrot.slane %v1706, 6
    %v1714 = vadd.f32 %v1661, %v1710
    %v1715 = vadd.f32 %v1662, %v1711
    %v1716 = vxor.u32 %v1714, 2147483648
    %v1717 = vmul.f32 %v1716, 1.442695
    %v1718 = vpow.pop %v1717
    %v1719 = vadd.f32 %v1718, 1.0
    %v1720 = vrcp.pop %v1719
    %v1721 = vmul.f32 %v1719, %v1720
    %v1722 = vsub.f32 1.0, %v1721
    %v1723 = vmul.f32 %v1720, %v1722
    %v1724 = vadd.f32 %v1720, %v1723
    %vm1725 = vweird.f32 %v1719
    %vm1726 = vweird.f32 %v1720
    %vm1727 = vmor %vm1725, %vm1726
    %v1728 = vsel %vm1727, %v1720, %v1724
    %v1729 = vand.u32 2147483647, %v1719
    %vm1730 = vcmp.eq.f32.partialorder %v1729, 8.507059e+37
    %v1731 = vand.u32 %v1719, 2147483648
    %v1732 = vor.u32 1.1754944e-38, %v1731
    %v1733 = vsel %vm1730, %v1732, %v1728
    %v1734 = vmul.f32 1.0, %v1733
    %v1735 = vtanh.pop %v1715
    %v1736 = vxor.u32 %v1715, 2147483648
    %v1737 = vmul.f32 %v1736, 1.442695
    %v1738 = vpow.pop %v1737
    %v1739 = vadd.f32 %v1738, 1.0
    %v1740 = vrcp.pop %v1739
    %v1741 = vmul.f32 %v1739, %v1740
    %v1742 = vsub.f32 1.0, %v1741
    %v1743 = vmul.f32 %v1740, %v1742
    %v1744 = vadd.f32 %v1740, %v1743
    %vm1745 = vweird.f32 %v1739
    %vm1746 = vweird.f32 %v1740
    %vm1747 = vmor %vm1745, %vm1746
    %v1748 = vsel %vm1747, %v1740, %v1744
    %v1749 = vand.u32 2147483647, %v1739
    %vm1750 = vcmp.eq.f32.partialorder %v1749, 8.507059e+37
    %v1751 = vand.u32 %v1739, 2147483648
    %v1752 = vor.u32 1.1754944e-38, %v1751
    %v1753 = vsel %vm1750, %v1752, %v1748
    %v1754 = vmul.f32 1.0, %v1753
    %v1756 = vrot.slane %v1658, 6
    %v1758 = vmul.f32 %v1734, %v1756
    %v1759 = vmul.f32 %v1734, %v1735
    %1761 = vrot.lane.b32.xlu0 %v1759, 64
    %v1762 = vpop.permute.xlu0 %1761
    %v1764 = vadd.f32 %v1758, %v1762
    %v1765 = vtanh.pop %v1764
    %v1766 = vmul.f32 %v1754, %v1765
    %v1767 = vld [vmem:[#allocation2 + $0x10] sm:$0x30]
    %v1768 = vld [vmem:[#allocation2 + $0x18] sm:$0x30]
    %v1770 = vrot.slane %v1766, 2
    %1771 = vrot.lane.b32.xlu0 %v1770, 64
    %v1772 = vpop.permute.xlu0 %1771
    %v1773 = vsel %vm156, %v1772, 0
    %1775 = vmatpush.msra.mxu0 0.0
    %1776 = vmatpush.msra.mxu0 0.0
    %1777 = vmatpush.msra.mxu0 0.0
    %1778 = vmatpush.msra.mxu0 0.0
    %1779 = vmatpush.msra.mxu0 0.0
    %1780 = vmatpush.msra.mxu0 0.0
    %1781 = vmatpush.msra.mxu0 0.0
    %1782 = vmatpush.msra.mxu0 0.0
    %1783 = vmatpush.msra.mxu0 %v1090
    %1784 = vmatpush.msra.mxu0 %v1088
    %1785 = vmatpush.msra.mxu0 %v1086
    %1786 = vmatpush.msra.mxu0 %v1084
    %1787 = vmatpush.msra.mxu0 %v1082
    %1788 = vmatpush.msra.mxu0 %v1080
    %1789 = vmatpush.msra.mxu0 %v1078
    %1790 = vmatpush.msra.mxu0 %v1076
    %1791 = vmatmul.f32.gmra.mxu0 %v1773
    %v1792 = vpop.f32.mrf.mxu0
    %v1793 = vadd.f32 0.0, %v1792
    %1794 = vdwg.mxu0
    %1795 = vmatpush.msra.mxu0 0.0
    %1796 = vmatpush.msra.mxu0 0.0
    %1797 = vmatpush.msra.mxu0 0.0
    %1798 = vmatpush.msra.mxu0 0.0
    %1799 = vmatpush.msra.mxu0 0.0
    %1800 = vmatpush.msra.mxu0 0.0
    %1801 = vmatpush.msra.mxu0 0.0
    %1802 = vmatpush.msra.mxu0 0.0
    %1803 = vmatpush.msra.mxu0 %v1091
    %1804 = vmatpush.msra.mxu0 %v1089
    %1805 = vmatpush.msra.mxu0 %v1087
    %1806 = vmatpush.msra.mxu0 %v1085
    %1807 = vmatpush.msra.mxu0 %v1083
    %1808 = vmatpush.msra.mxu0 %v1081
    %1809 = vmatpush.msra.mxu0 %v1079
    %1810 = vmatpush.msra.mxu0 %v1077
    %1811 = vmatmul.f32.gmra.mxu0 %v1773
    %v1812 = vpop.f32.mrf.mxu0
    %v1813 = vadd.f32 0.0, %v1812
    %1814 = vdwg.mxu0
    %v1817 = vrot.slane %v1793, 4
    %v1818 = vrot.slane %v1813, 4
    %v1821 = vadd.f32 %v1767, %v1817
    %v1822 = vadd.f32 %v1768, %v1818
    %v1823 = vxor.u32 %v1821, 2147483648
    %v1824 = vmul.f32 %v1823, 1.442695
    %v1825 = vpow.pop %v1824
    %v1826 = vadd.f32 %v1825, 1.0
    %v1827 = vrcp.pop %v1826
    %v1828 = vmul.f32 %v1826, %v1827
    %v1829 = vsub.f32 1.0, %v1828
    %v1830 = vmul.f32 %v1827, %v1829
    %v1831 = vadd.f32 %v1827, %v1830
    %vm1832 = vweird.f32 %v1826
    %vm1833 = vweird.f32 %v1827
    %vm1834 = vmor %vm1832, %vm1833
    %v1835 = vsel %vm1834, %v1827, %v1831
    %v1836 = vand.u32 2147483647, %v1826
    %vm1837 = vcmp.eq.f32.partialorder %v1836, 8.507059e+37
    %v1838 = vand.u32 %v1826, 2147483648
    %v1839 = vor.u32 1.1754944e-38, %v1838
    %v1840 = vsel %vm1837, %v1839, %v1835
    %v1841 = vmul.f32 1.0, %v1840
    %v1842 = vtanh.pop %v1822
    %v1843 = vxor.u32 %v1822, 2147483648
    %v1844 = vmul.f32 %v1843, 1.442695
    %v1845 = vpow.pop %v1844
    %v1846 = vadd.f32 %v1845, 1.0
    %v1847 = vrcp.pop %v1846
    %v1848 = vmul.f32 %v1846, %v1847
    %v1849 = vsub.f32 1.0, %v1848
    %v1850 = vmul.f32 %v1847, %v1849
    %v1851 = vadd.f32 %v1847, %v1850
    %vm1852 = vweird.f32 %v1846
    %vm1853 = vweird.f32 %v1847
    %vm1854 = vmor %vm1852, %vm1853
    %v1855 = vsel %vm1854, %v1847, %v1851
    %v1856 = vand.u32 2147483647, %v1846
    %vm1857 = vcmp.eq.f32.partialorder %v1856, 8.507059e+37
    %v1858 = vand.u32 %v1846, 2147483648
    %v1859 = vor.u32 1.1754944e-38, %v1858
    %v1860 = vsel %vm1857, %v1859, %v1855
    %v1861 = vmul.f32 1.0, %v1860
    %v1863 = vrot.slane %v1764, 6
    %v1865 = vmul.f32 %v1841, %v1863
    %v1866 = vmul.f32 %v1841, %v1842
    %1868 = vrot.lane.b32.xlu0 %v1866, 64
    %v1869 = vpop.permute.xlu0 %1868
    %v1871 = vadd.f32 %v1865, %v1869
    %v1872 = vtanh.pop %v1871
    %v1873 = vmul.f32 %v1861, %v1872
    %v1874 = vld [vmem:[#allocation2 + $0x10] sm:$0xc0]
    %v1875 = vld [vmem:[#allocation2 + $0x18] sm:$0xc0]
    %v1877 = vrot.slane %v1873, 4
    %1878 = vrot.lane.b32.xlu0 %v1877, 64
    %v1879 = vpop.permute.xlu0 %1878
    %v1880 = vsel %vm156, %v1879, 0
    %1882 = vmatpush.msra.mxu0 0.0
    %1883 = vmatpush.msra.mxu0 0.0
    %1884 = vmatpush.msra.mxu0 0.0
    %1885 = vmatpush.msra.mxu0 0.0
    %1886 = vmatpush.msra.mxu0 0.0
    %1887 = vmatpush.msra.mxu0 0.0
    %1888 = vmatpush.msra.mxu0 0.0
    %1889 = vmatpush.msra.mxu0 0.0
    %1890 = vmatpush.msra.mxu0 %v1090
    %1891 = vmatpush.msra.mxu0 %v1088
    %1892 = vmatpush.msra.mxu0 %v1086
    %1893 = vmatpush.msra.mxu0 %v1084
    %1894 = vmatpush.msra.mxu0 %v1082
    %1895 = vmatpush.msra.mxu0 %v1080
    %1896 = vmatpush.msra.mxu0 %v1078
    %1897 = vmatpush.msra.mxu0 %v1076
    %1898 = vmatmul.f32.gmra.mxu0 %v1880
    %v1899 = vpop.f32.mrf.mxu0
    %v1900 = vadd.f32 0.0, %v1899
    %1901 = vdwg.mxu0
    %1902 = vmatpush.msra.mxu0 0.0
    %1903 = vmatpush.msra.mxu0 0.0
    %1904 = vmatpush.msra.mxu0 0.0
    %1905 = vmatpush.msra.mxu0 0.0
    %1906 = vmatpush.msra.mxu0 0.0
    %1907 = vmatpush.msra.mxu0 0.0
    %1908 = vmatpush.msra.mxu0 0.0
    %1909 = vmatpush.msra.mxu0 0.0
    %1910 = vmatpush.msra.mxu0 %v1091
    %1911 = vmatpush.msra.mxu0 %v1089
    %1912 = vmatpush.msra.mxu0 %v1087
    %1913 = vmatpush.msra.mxu0 %v1085
    %1914 = vmatpush.msra.mxu0 %v1083
    %1915 = vmatpush.msra.mxu0 %v1081
    %1916 = vmatpush.msra.mxu0 %v1079
    %1917 = vmatpush.msra.mxu0 %v1077
    %1918 = vmatmul.f32.gmra.mxu0 %v1880
    %v1919 = vpop.f32.mrf.mxu0
    %v1920 = vadd.f32 0.0, %v1919
    %1921 = vdwg.mxu0
    %v1924 = vrot.slane %v1900, 2
    %v1925 = vrot.slane %v1920, 2
    %v1928 = vadd.f32 %v1874, %v1924
    %v1929 = vadd.f32 %v1875, %v1925
    %v1930 = vxor.u32 %v1928, 2147483648
    %v1931 = vmul.f32 %v1930, 1.442695
    %v1932 = vpow.pop %v1931
    %v1933 = vadd.f32 %v1932, 1.0
    %v1934 = vrcp.pop %v1933
    %v1935 = vmul.f32 %v1933, %v1934
    %v1936 = vsub.f32 1.0, %v1935
    %v1937 = vmul.f32 %v1934, %v1936
    %v1938 = vadd.f32 %v1934, %v1937
    %vm1939 = vweird.f32 %v1933
    %vm1940 = vweird.f32 %v1934
    %vm1941 = vmor %vm1939, %vm1940
    %v1942 = vsel %vm1941, %v1934, %v1938
    %v1943 = vand.u32 2147483647, %v1933
    %vm1944 = vcmp.eq.f32.partialorder %v1943, 8.507059e+37
    %v1945 = vand.u32 %v1933, 2147483648
    %v1946 = vor.u32 1.1754944e-38, %v1945
    %v1947 = vsel %vm1944, %v1946, %v1942
    %v1948 = vmul.f32 1.0, %v1947
    %v1949 = vtanh.pop %v1929
    %v1950 = vxor.u32 %v1929, 2147483648
    %v1951 = vmul.f32 %v1950, 1.442695
    %v1952 = vpow.pop %v1951
    %v1953 = vadd.f32 %v1952, 1.0
    %v1954 = vrcp.pop %v1953
    %v1955 = vmul.f32 %v1953, %v1954
    %v1956 = vsub.f32 1.0, %v1955
    %v1957 = vmul.f32 %v1954, %v1956
    %v1958 = vadd.f32 %v1954, %v1957
    %vm1959 = vweird.f32 %v1953
    %vm1960 = vweird.f32 %v1954
    %vm1961 = vmor %vm1959, %vm1960
    %v1962 = vsel %vm1961, %v1954, %v1958
    %v1963 = vand.u32 2147483647, %v1953
    %vm1964 = vcmp.eq.f32.partialorder %v1963, 8.507059e+37
    %v1965 = vand.u32 %v1953, 2147483648
    %v1966 = vor.u32 1.1754944e-38, %v1965
    %v1967 = vsel %vm1964, %v1966, %v1962
    %v1968 = vmul.f32 1.0, %v1967
    %v1970 = vrot.slane %v1871, 6
    %v1972 = vmul.f32 %v1948, %v1970
    %v1973 = vmul.f32 %v1948, %v1949
    %1975 = vrot.lane.b32.xlu0 %v1973, 64
    %v1976 = vpop.permute.xlu0 %1975
    %v1978 = vadd.f32 %v1972, %v1976
    %v1979 = vtanh.pop %v1978
    %v1980 = vmul.f32 %v1968, %v1979
    %1982 = vrot.lane.b32.xlu0 %v1980, 64
    %v1983 = vpop.permute.xlu0 %1982
    %v1985 = vrot.slane %v1239, 2
    %v1987 = vsel %vm156, %v1983, %v1985
    %v1988 = vld [vmem:[%s7] sm:$0xff]
    %v1989 = vld [vmem:[%s7 + $0x8] sm:$0xff]
    %v1990 = vld [vmem:[%s7 + $0x10] sm:$0xff]
    %v1991 = vld [vmem:[%s7 + $0x18] sm:$0xff]
    %v1992 = vld [vmem:[%s7 + $0x20] sm:$0xff]
    %v1993 = vld [vmem:[%s7 + $0x28] sm:$0xff]
    %v1994 = vld [vmem:[%s7 + $0x30] sm:$0xff]
    %v1995 = vld [vmem:[%s7 + $0x38] sm:$0xff]
    %v1996 = vld [vmem:[%s7 + $0x40] sm:$0xff]
    %v1997 = vld [vmem:[%s7 + $0x48] sm:$0xff]
    %v1998 = vld [vmem:[%s7 + $0x50] sm:$0xff]
    %v1999 = vld [vmem:[%s7 + $0x58] sm:$0xff]
    %v2000 = vld [vmem:[%s7 + $0x60] sm:$0xff]
    %v2001 = vld [vmem:[%s7 + $0x68] sm:$0xff]
    %v2002 = vld [vmem:[%s7 + $0x70] sm:$0xff]
    %v2003 = vld [vmem:[%s7 + $0x78] sm:$0xff]
    %v2004 = vld [vmem:[%s8] sm:$0x1]
    %v2006 = vperm.slane %v2004, 0
    %v2009 = vrot.slane %v1987, 6
    %2011 = vmatpush.msra.mxu0 %v2003
    %2012 = vmatpush.msra.mxu0 %v2002
    %2013 = vmatpush.msra.mxu0 %v2001
    %2014 = vmatpush.msra.mxu0 %v2000
    %2015 = vmatpush.msra.mxu0 %v1999
    %2016 = vmatpush.msra.mxu0 %v1998
    %2017 = vmatpush.msra.mxu0 %v1997
    %2018 = vmatpush.msra.mxu0 %v1996
    %2019 = vmatpush.msra.mxu0 %v1995
    %2020 = vmatpush.msra.mxu0 %v1994
    %2021 = vmatpush.msra.mxu0 %v1993
    %2022 = vmatpush.msra.mxu0 %v1992
    %2023 = vmatpush.msra.mxu0 %v1991
    %2024 = vmatpush.msra.mxu0 %v1990
    %2025 = vmatpush.msra.mxu0 %v1989
    %2026 = vmatpush.msra.mxu0 %v1988
    %2027 = vmatmul.f32.gmra.mxu0 %v2009
    %v2028 = vpop.f32.mrf.mxu0
    %v2029 = vadd.f32 %v2006, %v2028
    %2030 = vdwg.mxu0
    %vm2031 = vcmask 58368
    %2032 = vst.msk [vmem:[#allocation8] sm:$0x3] %vm2031, %v2029
    // Predicated region
    $region46: #{bilstm_forward.1} parent=1 // pred_check
      _
    $region47: #{bilstm_forward.1} parent=1 // pred_check_branch
      %2034 = sbr.rel (0) target = $region49
    $region48: #{bilstm_forward.1} parent=1 // pred_region
      %2036 = vsyncadd [#allocation5], 0
      %s2038 = sshll.u32 [#allocation8], 4
      %s2039 = int_to_ptr.vmem [resolvable:$true] %s2038
      %s2040 = sshll.u32 %s9, 4
      %s2041 = int_to_ptr.hbm [resolvable:$true] %s2040
      %2043 = dma.vmem_to_hbm [thread:$0]  %s2039, 32, %s2041, [#allocation5]
    $region49: #{bilstm_forward.1} parent=1 // pred_fallthru
      _
    // Predicated region
    $region50: #{bilstm_forward.1} parent=1 // pred_check
      _
    $region51: #{bilstm_forward.1} parent=1 // pred_check_branch
      %2045 = sbr.rel (0) target = $region53
    $region52: #{bilstm_forward.1} parent=1 // pred_region
      %2047 = dma.done [#allocation5], 32
    $region53: #{bilstm_forward.1} parent=1 // pred_fallthru
      _
    %2048 = vsyncpa [#allocation4], 1
    %2049 = vsyncpa [#allocation7], 1
    %2050 = vsyncpa [#allocation5], 1

</llo_original>
